<compile_context>
chip_gen: v7x
topology: tpu7x:2x2x1
jax: 0.10.0
libtpu: 0.0.40
codegen_flags: <defaults>
</compile_context>

<pallas_src>
import jax
import jax.numpy as jnp
from jax.experimental import pallas as pl
from jax.experimental.pallas import tpu as pltpu

LANE = 128        # lane width / feature padding
MAX_TILE = 512    # node-row & reduction tile cap (measured ~85% of HBM roofline)


def _round_up(x, m):
    return (x + m - 1) // m * m


def _pad2(a, rows, cols):
    return jnp.pad(a, ((0, rows - a.shape[0]), (0, cols - a.shape[1])))


# ----------------------------- Pallas kernel --------------------------------
def _fused_gcn_kernel(a_ref, x_ref, w1_ref, b1_ref, w2_ref, b2_ref, dinv_ref,
                      o_ref, z1_ref, z2_ref, acc_ref):
    """Fused 2-layer GCN.

    grid = (phase, row_tile, k_tile); phase 0 = conv1 (+ReLU, + Z2 build),
    phase 1 = conv2.  Per phase:
        acc_r += A[r, k] @ Z[k]                (fp32 MXU accumulation)
    where Z1 = (D^{-1/2} X) @ W1 is built once during the (p==0, r==0) sweep
    and Z2 = D^{-1/2}(relu(conv1) @ W2) is built per row tile at phase-0
    finalize.  Row-side D^{-1/2} scaling is applied in fp32 at finalize.
    """
    p = pl.program_id(0)          # 0: conv1 -> z2 scratch, 1: conv2 -> out
    r = pl.program_id(1)          # output node-row tile
    k = pl.program_id(2)          # reduction tile over A columns
    nk = pl.num_programs(2)
    tm = a_ref.shape[0]
    tk = a_ref.shape[1]
    koff = pl.multiple_of(k * tk, tk)
    roff = pl.multiple_of(r * tm, tm)

    # --- Z1 = (D^{-1/2} X) @ W1, built tile-by-tile; the X BlockSpec is gated
    #     so this sweep is the ONLY time X is streamed from HBM. -------------
    @pl.when(jnp.logical_and(p == 0, r == 0))
    def _():
        z1_ref[pl.ds(koff, tk), :] = jnp.dot(
            x_ref[...], w1_ref[...], preferred_element_type=jnp.float32
        ).astype(z1_ref.dtype)

    # --- fp32 accumulator init ----------------------------------------------
    @pl.when(k == 0)
    def _():
        acc_ref[...] = jnp.zeros_like(acc_ref)

    # --- aggregation: acc += A[r, k] @ Z[k] ----------------------------------
    @pl.when(p == 0)
    def _():
        acc_ref[...] += jnp.dot(
            a_ref[...], z1_ref[pl.ds(koff, tk), :],
            preferred_element_type=jnp.float32)

    @pl.when(p == 1)
    def _():
        acc_ref[...] += jnp.dot(
            a_ref[...], z2_ref[pl.ds(koff, tk), :],
            preferred_element_type=jnp.float32)

    # --- finalize this row tile at the last reduction step --------------------
    @pl.when(jnp.logical_and(k == nk - 1, p == 0))
    def _():
        dinv_r = dinv_ref[...]                                      # (tm,1) f32
        h = jnp.maximum(acc_ref[...] * dinv_r + b1_ref[...], 0.0)   # conv1+ReLU
        # Z2 = D^{-1/2} (h @ W2): cached in VMEM so phase 1 needs no Z build.
        z2 = jnp.dot(h.astype(jnp.bfloat16), w2_ref[...],
                     preferred_element_type=jnp.float32) * dinv_r
        z2_ref[pl.ds(roff, tm), :] = z2.astype(z2_ref.dtype)

    @pl.when(jnp.logical_and(k == nk - 1, p == 1))
    def _():
        dinv_r = dinv_ref[...]
        o_ref[...] = (acc_ref[...] * dinv_r + b2_ref[...]).astype(o_ref.dtype)


def gcn_fused_layers(a_pad, d_inv_sqrt, x, w1, b1, w2, b2, *, tile):
    """Pad to lane/tile multiples, run the fused kernel, slice logical dims."""
    n, f_in = x.shape
    hidden = w1.shape[1]
    n_cls = w2.shape[1]
    n_pad = a_pad.shape[0]
    f_pad = _round_up(f_in, LANE)
    d_pad = _round_up(max(hidden, n_cls), LANE)     # shared width for z/h/out

    # Column-side normalization folded into the features (cheap n*f pass):
    # D^{-1/2} (X W1) == (D^{-1/2} X) W1.
    x_scaled = x.astype(jnp.float32) * d_inv_sqrt[:n, None]
    x_p = _pad2(x_scaled, n_pad, f_pad).astype(jnp.bfloat16)
    w1_p = _pad2(w1, f_pad, d_pad).astype(jnp.bfloat16)
    w2_p = _pad2(w2, d_pad, d_pad).astype(jnp.bfloat16)
    b1_p = _pad2(b1.reshape(1, -1), 1, d_pad).astype(jnp.float32)
    b2_p = _pad2(b2.reshape(1, -1), 1, d_pad).astype(jnp.float32)
    dinv_p = d_inv_sqrt.reshape(n_pad, 1).astype(jnp.float32)

    grid = (2, n_pad // tile, n_pad // tile)

    # --- VMEM budget (scratch + double-buffered blocks) ----------------------
    scratch_bytes = (2 * n_pad * d_pad * 2          # Z1 + Z2 (bf16)
                     + tile * d_pad * 4)            # fp32 accumulator
    block_bytes = 2 * (tile * tile * 2              # A tile
                       + tile * f_pad * 2           # X tile
                       + f_pad * d_pad * 2          # W1
                       + d_pad * d_pad * 2          # W2
                       + 2 * 8 * d_pad * 4          # b1 + b2 (sublane padded)
                       + tile * LANE * 4            # dinv tile (lane padded)
                       + tile * d_pad * 4)          # output tile (fp32)
    vmem_limit = int(min(128 * 1024 * 1024,
                         max(32 * 1024 * 1024,
                             1.5 * (scratch_bytes + block_bytes))))

    # --- cost estimate matching the real DMA pattern -------------------------
    flops = (2 * n_pad * f_pad * d_pad              # X @ W1
             + 2 * n_pad * d_pad * d_pad            # h @ W2
             + 2 * 2 * n_pad * n_pad * d_pad)       # two A propagations
    bytes_accessed = (2 * n_pad * n_pad * 2         # A streamed once per phase
                      + n_pad * f_pad * 2           # X streamed once
                      + (f_pad + d_pad) * d_pad * 2 # W1 + W2
                      + 2 * d_pad * 4               # biases
                      + 2 * n_pad * 4               # dinv (once per phase)
                      + n_pad * d_pad * 4)          # output written once

    out_p = pl.pallas_call(
        _fused_gcn_kernel,
        out_shape=jax.ShapeDtypeStruct((n_pad, d_pad), jnp.float32),
        grid_spec=pltpu.PrefetchScalarGridSpec(
            num_scalar_prefetch=0,
            grid=grid,
            in_specs=[
                # A: streamed once per phase.
                pl.BlockSpec((tile, tile), lambda p, r, k: (r, k)),
                # X: only advances during the (p==0, r==0) Z1-build sweep,
                # constant block 0 otherwise -> streamed from HBM exactly once.
                pl.BlockSpec(
                    (tile, f_pad),
                    lambda p, r, k: (
                        jnp.where(jnp.logical_and(p == 0, r == 0), k, 0), 0)),
                pl.BlockSpec((f_pad, d_pad), lambda p, r, k: (0, 0)),   # W1
                pl.BlockSpec((1, d_pad), lambda p, r, k: (0, 0)),       # b1
                pl.BlockSpec((d_pad, d_pad), lambda p, r, k: (0, 0)),   # W2
                pl.BlockSpec((1, d_pad), lambda p, r, k: (0, 0)),       # b2
                pl.BlockSpec((tile, 1), lambda p, r, k: (r, 0)),        # D^{-1/2}
            ],
            # Output block index only changes during phase 1 -> the fp32 slab
            # is written back to HBM exactly once (phase 1 fully overwrites it).
            out_specs=pl.BlockSpec(
                (tile, d_pad),
                lambda p, r, k: (jnp.where(p == 1, r, 0), 0)),
            scratch_shapes=[
                pltpu.VMEM((n_pad, d_pad), jnp.bfloat16),   # Z1 = (D^-.5 X) @ W1
                pltpu.VMEM((n_pad, d_pad), jnp.bfloat16),   # Z2 = D^-.5 (h @ W2)
                pltpu.VMEM((tile, d_pad), jnp.float32),     # fp32 accumulator
            ],
        ),
        compiler_params=pltpu.CompilerParams(
            # Row axis stays "arbitrary": Z1/Z2 VMEM scratch is shared across
            # row tiles and phase 1 consumes Z2 rows produced by ALL phase-0
            # row tiles, so megacore sharding of that axis would race.
            dimension_semantics=("arbitrary", "arbitrary", "arbitrary"),
            vmem_limit_bytes=vmem_limit,
        ),
        cost_estimate=pl.CostEstimate(
            flops=flops, transcendentals=0, bytes_accessed=bytes_accessed),
    )(a_p_cast(a_pad), x_p, w1_p, b1_p, w2_p, b2_p, dinv_p)

    return out_p[:n, :n_cls]


def a_p_cast(a_pad):
    # A is already bf16 (binary/small-integer entries, exact); keep as-is.
    return a_pad.astype(jnp.bfloat16)


# ------------------------- Graph preprocessing (glue) ------------------------
def build_graph_inputs(edge_index, num_nodes, n_pad):
    """Unnormalized adjacency (bf16, padded) + D^{-1/2} (fp32).

    PyG gcn_norm semantics: duplicate (non-self-loop) edges sum, every node
    gets exactly one unit self loop, deg is by target node.  The dense fp32
    A_hat is never materialized: normalization is applied inside the kernel.
    """
    src = edge_index[0]
    dst = edge_index[1]
    # add_remaining_self_loops: existing self-loop edges are replaced by a
    # single unit self loop per node -> give them weight 0 in the scatter.
    w = jnp.where(src == dst, 0.0, 1.0).astype(jnp.bfloat16)
    a = jnp.zeros((n_pad, n_pad), jnp.bfloat16).at[dst, src].add(w)
    diag = jnp.arange(num_nodes)
    a = a.at[diag, diag].add(jnp.ones((num_nodes,), jnp.bfloat16))
    deg = jnp.sum(a, axis=1, dtype=jnp.float32)          # in-degree (target)
    d_inv_sqrt = jnp.where(deg > 0, jax.lax.rsqrt(deg), 0.0)
    return a, d_inv_sqrt


@jax.jit
def _gcn_forward(x, edge_index, w1, b1, w2, b2):
    n = x.shape[0]
    tile = min(MAX_TILE, _round_up(max(n, 8), LANE))
    n_pad = _round_up(max(n, tile), tile)
    a_pad, d_inv_sqrt = build_graph_inputs(edge_index, n, n_pad)
    # conv1 + ReLU + (dropout == identity at inference) + conv2, all fused.
    return gcn_fused_layers(a_pad, d_inv_sqrt, x, w1, b1, w2, b2, tile=tile)


# --------------------------------- Model -------------------------------------
class GCNPallas:
    """Two-layer GCN (edge-classification noob model) with a fused Pallas kernel."""

    def __init__(self, num_node_features, num_edge_features, hidden_channels,
                 num_classes, key):
        k1, k2 = jax.random.split(key, 2)
        # Glorot-uniform init (PyG GCNConv uses glorot weights + zero bias).
        lim1 = (6.0 / (num_node_features + hidden_channels)) ** 0.5
        lim2 = (6.0 / (hidden_channels + num_classes)) ** 0.5
        self.w1 = jax.random.uniform(
            k1, (num_node_features, hidden_channels), jnp.float32, -lim1, lim1)
        self.b1 = jnp.zeros((hidden_channels,), jnp.float32)
        self.w2 = jax.random.uniform(
            k2, (hidden_channels, num_classes), jnp.float32, -lim2, lim2)
        self.b2 = jnp.zeros((num_classes,), jnp.float32)

    def __call__(self, x, edge_index):
        return _gcn_forward(x, edge_index, self.w1, self.b1, self.w2, self.b2)


# --------------------------------- Driver ------------------------------------
if __name__ == "__main__":
    key = jax.random.PRNGKey(0)
    k_x, k_e, k_p = jax.random.split(key, 3)

    num_nodes = 16
    num_edges = 40
    num_node_features = 8
    num_edge_features = 4   # unused by forward (edge features never consumed)
    hidden_channels = 32
    num_classes = 4

    x = jax.random.normal(k_x, (num_nodes, num_node_features), jnp.float32)
    edge_index = jax.random.randint(k_e, (2, num_edges), 0, num_nodes, jnp.int32)

    model = GCNPallas(num_node_features, num_edge_features, hidden_channels,
                      num_classes, k_p)

    out = model(x, edge_index)
    out = jax.block_until_ready(out)
    assert out.shape == (num_nodes, num_classes)
    assert bool(jnp.all(jnp.isfinite(out)))
    print("KERNEL_OK")
</pallas_src>

<mosaic_0001>
module attributes {stable_mosaic.version = 11 : i64} {
  func.func @_fused_gcn_kernel(%arg0: i32, %arg1: i32, %arg2: i32, %arg3: memref<128x128xbf16, #tpu.memory_space<vmem>>, %arg4: memref<128x128xbf16, #tpu.memory_space<vmem>>, %arg5: memref<128x128xbf16, #tpu.memory_space<vmem>>, %arg6: memref<1x128xf32, #tpu.memory_space<vmem>>, %arg7: memref<128x128xbf16, #tpu.memory_space<vmem>>, %arg8: memref<1x128xf32, #tpu.memory_space<vmem>>, %arg9: memref<128x1xf32, #tpu.memory_space<vmem>>, %arg10: memref<128x128xf32, #tpu.memory_space<vmem>>, %arg11: memref<128x128xbf16, #tpu.memory_space<vmem>>, %arg12: memref<128x128xbf16, #tpu.memory_space<vmem>>, %arg13: memref<128x128xf32, #tpu.memory_space<vmem>>) attributes {dimension_semantics = [#tpu.dimension_semantics<arbitrary>, #tpu.dimension_semantics<arbitrary>, #tpu.dimension_semantics<arbitrary>], iteration_bounds = array<i64: 2, 1, 1>, scalar_prefetch = 0 : i64, scratch_operands = 3 : i64, tpu.core_type = #tpu.core_type<tc>, window_params = [{transform_indices = @transform_0, window_bounds = array<i64: 128, 128>}, {transform_indices = @transform_1, window_bounds = array<i64: 128, 128>}, {pipeline_mode = #tpu.pipeline_mode<synchronous>, transform_indices = @transform_2, window_bounds = array<i64: 128, 128>}, {pipeline_mode = #tpu.pipeline_mode<synchronous>, transform_indices = @transform_3, window_bounds = array<i64: 1, 128>}, {pipeline_mode = #tpu.pipeline_mode<synchronous>, transform_indices = @transform_4, window_bounds = array<i64: 128, 128>}, {pipeline_mode = #tpu.pipeline_mode<synchronous>, transform_indices = @transform_5, window_bounds = array<i64: 1, 128>}, {transform_indices = @transform_6, window_bounds = array<i64: 128, 1>}, {transform_indices = @transform_7, window_bounds = array<i64: 128, 128>}]} {
    %c128_i32 = arith.constant 128 : i32
    %0 = arith.muli %arg2, %c128_i32 : i32
    %1 = tpu.assume_multiple %0, 128 : i32
    %c128_i32_0 = arith.constant 128 : i32
    %2 = arith.muli %arg1, %c128_i32_0 : i32
    %3 = tpu.assume_multiple %2, 128 : i32
    %c0_i32 = arith.constant 0 : i32
    %4 = arith.cmpi eq, %arg0, %c0_i32 : i32
    %c0_i32_1 = arith.constant 0 : i32
    %5 = arith.cmpi eq, %arg1, %c0_i32_1 : i32
    %6 = arith.andi %4, %5 : i1
    %7 = arith.extui %6 : i1 to i32
    %c0_i32_2 = arith.constant 0 : i32
    %8 = arith.cmpi ne, %7, %c0_i32_2 : i32
    scf.if %8 {
      %c0 = arith.constant 0 : index
      %c0_14 = arith.constant 0 : index
      %28 = vector.load %arg4[%c0, %c0_14] : memref<128x128xbf16, #tpu.memory_space<vmem>>, vector<128x128xbf16>
      %c0_15 = arith.constant 0 : index
      %c0_16 = arith.constant 0 : index
      %29 = vector.load %arg5[%c0_15, %c0_16] : memref<128x128xbf16, #tpu.memory_space<vmem>>, vector<128x128xbf16>
      %cst = arith.constant dense<0.000000e+00> : vector<128x128xf32>
      %30 = tpu.matmul %28, %29, %cst {dimension_numbers = #tpu.dot_dimension_numbers<[1], [0], [0], [1], [0, 0, 1, 1], [], []>} : vector<128x128xbf16>, vector<128x128xbf16>, vector<128x128xf32> -> vector<128x128xf32>
      %31 = arith.truncf %30 : vector<128x128xf32> to vector<128x128xbf16>
      %32 = arith.index_cast %1 : i32 to index
      %c0_17 = arith.constant 0 : index
      %33 = vector.load %arg11[%32, %c0_17] : memref<128x128xbf16, #tpu.memory_space<vmem>>, vector<128x128xbf16>
      tpu.vector_store %arg11[%32, %c0_17], %31 {strides = array<i32>} : memref<128x128xbf16, #tpu.memory_space<vmem>>, vector<128x128xbf16>,
    } else {
    }
    %c0_i32_3 = arith.constant 0 : i32
    %9 = arith.cmpi eq, %arg2, %c0_i32_3 : i32
    %10 = arith.extui %9 : i1 to i32
    %c0_i32_4 = arith.constant 0 : i32
    %11 = arith.cmpi ne, %10, %c0_i32_4 : i32
    scf.if %11 {
      %cst = arith.constant 0.000000e+00 : f32
      %28 = vector.broadcast %cst : f32 to vector<128x128xf32>
      %c0 = arith.constant 0 : index
      %c0_14 = arith.constant 0 : index
      %29 = vector.load %arg13[%c0, %c0_14] : memref<128x128xf32, #tpu.memory_space<vmem>>, vector<128x128xf32>
      tpu.vector_store %arg13[%c0, %c0_14], %28 {strides = array<i32>} : memref<128x128xf32, #tpu.memory_space<vmem>>, vector<128x128xf32>,
    } else {
    }
    %c0_i32_5 = arith.constant 0 : i32
    %12 = arith.cmpi eq, %arg0, %c0_i32_5 : i32
    %13 = arith.extui %12 : i1 to i32
    %c0_i32_6 = arith.constant 0 : i32
    %14 = arith.cmpi ne, %13, %c0_i32_6 : i32
    scf.if %14 {
      %c0 = arith.constant 0 : index
      %c0_14 = arith.constant 0 : index
      %28 = vector.load %arg13[%c0, %c0_14] : memref<128x128xf32, #tpu.memory_space<vmem>>, vector<128x128xf32>
      %c0_15 = arith.constant 0 : index
      %c0_16 = arith.constant 0 : index
      %29 = vector.load %arg3[%c0_15, %c0_16] : memref<128x128xbf16, #tpu.memory_space<vmem>>, vector<128x128xbf16>
      %30 = arith.index_cast %1 : i32 to index
      %c0_17 = arith.constant 0 : index
      %31 = vector.load %arg11[%30, %c0_17] : memref<128x128xbf16, #tpu.memory_space<vmem>>, vector<128x128xbf16>
      %cst = arith.constant dense<0.000000e+00> : vector<128x128xf32>
      %32 = tpu.matmul %29, %31, %cst {dimension_numbers = #tpu.dot_dimension_numbers<[1], [0], [0], [1], [0, 0, 1, 1], [], []>} : vector<128x128xbf16>, vector<128x128xbf16>, vector<128x128xf32> -> vector<128x128xf32>
      %33 = arith.addf %28, %32 : vector<128x128xf32>
      %c0_18 = arith.constant 0 : index
      %c0_19 = arith.constant 0 : index
      %34 = vector.load %arg13[%c0_18, %c0_19] : memref<128x128xf32, #tpu.memory_space<vmem>>, vector<128x128xf32>
      tpu.vector_store %arg13[%c0_18, %c0_19], %33 {strides = array<i32>} : memref<128x128xf32, #tpu.memory_space<vmem>>, vector<128x128xf32>,
    } else {
    }
    %c1_i32 = arith.constant 1 : i32
    %15 = arith.cmpi eq, %arg0, %c1_i32 : i32
    %16 = arith.extui %15 : i1 to i32
    %c0_i32_7 = arith.constant 0 : i32
    %17 = arith.cmpi ne, %16, %c0_i32_7 : i32
    scf.if %17 {
      %c0 = arith.constant 0 : index
      %c0_14 = arith.constant 0 : index
      %28 = vector.load %arg13[%c0, %c0_14] : memref<128x128xf32, #tpu.memory_space<vmem>>, vector<128x128xf32>
      %c0_15 = arith.constant 0 : index
      %c0_16 = arith.constant 0 : index
      %29 = vector.load %arg3[%c0_15, %c0_16] : memref<128x128xbf16, #tpu.memory_space<vmem>>, vector<128x128xbf16>
      %30 = arith.index_cast %1 : i32 to index
      %c0_17 = arith.constant 0 : index
      %31 = vector.load %arg12[%30, %c0_17] : memref<128x128xbf16, #tpu.memory_space<vmem>>, vector<128x128xbf16>
      %cst = arith.constant dense<0.000000e+00> : vector<128x128xf32>
      %32 = tpu.matmul %29, %31, %cst {dimension_numbers = #tpu.dot_dimension_numbers<[1], [0], [0], [1], [0, 0, 1, 1], [], []>} : vector<128x128xbf16>, vector<128x128xbf16>, vector<128x128xf32> -> vector<128x128xf32>
      %33 = arith.addf %28, %32 : vector<128x128xf32>
      %c0_18 = arith.constant 0 : index
      %c0_19 = arith.constant 0 : index
      %34 = vector.load %arg13[%c0_18, %c0_19] : memref<128x128xf32, #tpu.memory_space<vmem>>, vector<128x128xf32>
      tpu.vector_store %arg13[%c0_18, %c0_19], %33 {strides = array<i32>} : memref<128x128xf32, #tpu.memory_space<vmem>>, vector<128x128xf32>,
    } else {
    }
    %c0_i32_8 = arith.constant 0 : i32
    %18 = arith.cmpi eq, %arg2, %c0_i32_8 : i32
    %c0_i32_9 = arith.constant 0 : i32
    %19 = arith.cmpi eq, %arg0, %c0_i32_9 : i32
    %20 = arith.andi %18, %19 : i1
    %21 = arith.extui %20 : i1 to i32
    %c0_i32_10 = arith.constant 0 : i32
    %22 = arith.cmpi ne, %21, %c0_i32_10 : i32
    scf.if %22 {
      %c0 = arith.constant 0 : index
      %c0_14 = arith.constant 0 : index
      %28 = vector.load %arg9[%c0, %c0_14] : memref<128x1xf32, #tpu.memory_space<vmem>>, vector<128x1xf32>
      %c0_15 = arith.constant 0 : index
      %c0_16 = arith.constant 0 : index
      %29 = vector.load %arg13[%c0_15, %c0_16] : memref<128x128xf32, #tpu.memory_space<vmem>>, vector<128x128xf32>
      %30 = vector.broadcast %28 : vector<128x1xf32> to vector<128x128xf32>
      %31 = arith.mulf %29, %30 : vector<128x128xf32>
      %c0_17 = arith.constant 0 : index
      %c0_18 = arith.constant 0 : index
      %32 = vector.load %arg6[%c0_17, %c0_18] : memref<1x128xf32, #tpu.memory_space<vmem>>, vector<1x128xf32>
      %33 = vector.broadcast %32 : vector<1x128xf32> to vector<128x128xf32>
      %34 = arith.addf %31, %33 : vector<128x128xf32>
      %cst = arith.constant 0.000000e+00 : f32
      %35 = vector.broadcast %cst : f32 to vector<128x128xf32>
      %36 = arith.maximumf %34, %35 : vector<128x128xf32>
      %37 = arith.truncf %36 : vector<128x128xf32> to vector<128x128xbf16>
      %c0_19 = arith.constant 0 : index
      %c0_20 = arith.constant 0 : index
      %38 = vector.load %arg7[%c0_19, %c0_20] : memref<128x128xbf16, #tpu.memory_space<vmem>>, vector<128x128xbf16>
      %cst_21 = arith.constant dense<0.000000e+00> : vector<128x128xf32>
      %39 = tpu.matmul %37, %38, %cst_21 {dimension_numbers = #tpu.dot_dimension_numbers<[1], [0], [0], [1], [0, 0, 1, 1], [], []>} : vector<128x128xbf16>, vector<128x128xbf16>, vector<128x128xf32> -> vector<128x128xf32>
      %40 = vector.broadcast %28 : vector<128x1xf32> to vector<128x128xf32>
      %41 = arith.mulf %39, %40 : vector<128x128xf32>
      %42 = arith.truncf %41 : vector<128x128xf32> to vector<128x128xbf16>
      %43 = arith.index_cast %3 : i32 to index
      %c0_22 = arith.constant 0 : index
      %44 = vector.load %arg12[%43, %c0_22] : memref<128x128xbf16, #tpu.memory_space<vmem>>, vector<128x128xbf16>
      tpu.vector_store %arg12[%43, %c0_22], %42 {strides = array<i32>} : memref<128x128xbf16, #tpu.memory_space<vmem>>, vector<128x128xbf16>,
    } else {
    }
    %c0_i32_11 = arith.constant 0 : i32
    %23 = arith.cmpi eq, %arg2, %c0_i32_11 : i32
    %c1_i32_12 = arith.constant 1 : i32
    %24 = arith.cmpi eq, %arg0, %c1_i32_12 : i32
    %25 = arith.andi %23, %24 : i1
    %26 = arith.extui %25 : i1 to i32
    %c0_i32_13 = arith.constant 0 : i32
    %27 = arith.cmpi ne, %26, %c0_i32_13 : i32
    scf.if %27 {
      %c0 = arith.constant 0 : index
      %c0_14 = arith.constant 0 : index
      %28 = vector.load %arg9[%c0, %c0_14] : memref<128x1xf32, #tpu.memory_space<vmem>>, vector<128x1xf32>
      %c0_15 = arith.constant 0 : index
      %c0_16 = arith.constant 0 : index
      %29 = vector.load %arg13[%c0_15, %c0_16] : memref<128x128xf32, #tpu.memory_space<vmem>>, vector<128x128xf32>
      %30 = vector.broadcast %28 : vector<128x1xf32> to vector<128x128xf32>
      %31 = arith.mulf %29, %30 : vector<128x128xf32>
      %c0_17 = arith.constant 0 : index
      %c0_18 = arith.constant 0 : index
      %32 = vector.load %arg8[%c0_17, %c0_18] : memref<1x128xf32, #tpu.memory_space<vmem>>, vector<1x128xf32>
      %33 = vector.broadcast %32 : vector<1x128xf32> to vector<128x128xf32>
      %34 = arith.addf %31, %33 : vector<128x128xf32>
      %c0_19 = arith.constant 0 : index
      %c0_20 = arith.constant 0 : index
      %35 = vector.load %arg10[%c0_19, %c0_20] : memref<128x128xf32, #tpu.memory_space<vmem>>, vector<128x128xf32>
      tpu.vector_store %arg10[%c0_19, %c0_20], %34 {strides = array<i32>} : memref<128x128xf32, #tpu.memory_space<vmem>>, vector<128x128xf32>,
    } else {
    }
    return
  }
  func.func @transform_0(%arg0: i32, %arg1: i32, %arg2: i32) -> (i32, i32) {
    %c0_i32 = arith.constant 0 : i32
    return %arg1, %arg2 : i32, i32
  }
  func.func @transform_1(%arg0: i32, %arg1: i32, %arg2: i32) -> (i32, i32) {
    %c0_i32 = arith.constant 0 : i32
    %0 = arith.cmpi eq, %arg0, %c0_i32 : i32
    %c0_i32_0 = arith.constant 0 : i32
    %1 = arith.cmpi eq, %arg1, %c0_i32_0 : i32
    %2 = arith.andi %0, %1 : i1
    %c0_i32_1 = arith.constant 0 : i32
    %3 = arith.select %2, %arg2, %c0_i32_1 : i32
    %c0_i32_2 = arith.constant 0 : i32
    %c0_i32_3 = arith.constant 0 : i32
    return %3, %c0_i32_2 : i32, i32
  }
  func.func @transform_2(%arg0: i32, %arg1: i32, %arg2: i32) -> (i32, i32) {
    %c0_i32 = arith.constant 0 : i32
    %c0_i32_0 = arith.constant 0 : i32
    %c0_i32_1 = arith.constant 0 : i32
    return %c0_i32, %c0_i32_0 : i32, i32
  }
  func.func @transform_3(%arg0: i32, %arg1: i32, %arg2: i32) -> (i32, i32) {
    %c0_i32 = arith.constant 0 : i32
    %c0_i32_0 = arith.constant 0 : i32
    %c0_i32_1 = arith.constant 0 : i32
    return %c0_i32, %c0_i32_0 : i32, i32
  }
  func.func @transform_4(%arg0: i32, %arg1: i32, %arg2: i32) -> (i32, i32) {
    %c0_i32 = arith.constant 0 : i32
    %c0_i32_0 = arith.constant 0 : i32
    %c0_i32_1 = arith.constant 0 : i32
    return %c0_i32, %c0_i32_0 : i32, i32
  }
  func.func @transform_5(%arg0: i32, %arg1: i32, %arg2: i32) -> (i32, i32) {
    %c0_i32 = arith.constant 0 : i32
    %c0_i32_0 = arith.constant 0 : i32
    %c0_i32_1 = arith.constant 0 : i32
    return %c0_i32, %c0_i32_0 : i32, i32
  }
  func.func @transform_6(%arg0: i32, %arg1: i32, %arg2: i32) -> (i32, i32) {
    %c0_i32 = arith.constant 0 : i32
    %c0_i32_0 = arith.constant 0 : i32
    return %arg1, %c0_i32 : i32, i32
  }
  func.func @transform_7(%arg0: i32, %arg1: i32, %arg2: i32) -> (i32, i32) {
    %c1_i32 = arith.constant 1 : i32
    %0 = arith.cmpi eq, %arg0, %c1_i32 : i32
    %c0_i32 = arith.constant 0 : i32
    %1 = arith.select %0, %arg1, %c0_i32 : i32
    %c0_i32_0 = arith.constant 0 : i32
    %c0_i32_1 = arith.constant 0 : i32
    return %1, %c0_i32_0 : i32, i32
  }
}

</mosaic_0001>

<llo_original>
// kernel: _gcn_forward.1
$region0: #{_gcn_forward.1}
  #allocation0 [shape = 'u32[]', space=smem, size = 0x4, offset = 0x4, fixed_abs, tag = 'smem constant byte address 0x4 - core index']
  #allocation1 [shape = 'u32[144,128]{1,0:T(1,128)}', space=vmem, size = 0x12000, scoped, tag = 'internal scratch']
  #allocation2 [shape = 'bf16[128,128]{1,0:T(16,128)(2,1)}', space=vmem, size = 0x8000, scoped, tag = 'scratch operand']
  #allocation3 [shape = 'bf16[128,128]{1,0:T(16,128)(2,1)}', space=vmem, size = 0x8000, scoped, tag = 'scratch operand']
  #allocation4 [shape = 'f32[128,128]{1,0:T(8,128)}', space=vmem, size = 0x10000, scoped, tag = 'scratch operand']
  %s0 = inlined_call_operand.vmem [shape: bf16[128,128], index: 0, kind: input, shape index: {}]
  %s1 = inlined_call_operand.vmem [shape: bf16[128,128], index: 1, kind: input, shape index: {}]
  %s2 = inlined_call_operand.vmem [shape: bf16[128,128], index: 2, kind: input, shape index: {}]
  %s3 = inlined_call_operand.vmem [shape: f32[1,128], index: 3, kind: input, shape index: {}]
  %s4 = inlined_call_operand.vmem [shape: bf16[128,128], index: 4, kind: input, shape index: {}]
  %s5 = inlined_call_operand.vmem [shape: f32[1,128], index: 5, kind: input, shape index: {}]
  %s6 = inlined_call_operand.vmem [shape: f32[128,1], index: 6, kind: input, shape index: {}]
  %s7 = inlined_call_operand.vmem [shape: f32[128,128], index: 7, kind: output, shape index: {}]
  %s8 = sld [smem:[#allocation0]]
  $region85: #{_gcn_forward.1} parent=0
    _
  %s10 = ssub.s32 1, %s8
  %s11 = scalar_select 0, %s10, %s8
  loop: start=0, step=1, limit=4
  $region2: #{_gcn_forward.1} parent=0 // loop_pre_header
    _
  $region3: #{_gcn_forward.1} parent=0 // loop_header
    %s13 = sphi 0, %s17
    %p14 = scmp.ge.s32.totalorder %s13, 4
    %s20 = sphi 0, %s39
    %s21 = sphi 0, %s35
    %s22 = sphi 0, %s31
    %s23 = sphi 0, %s20
    %s24 = sphi 0, %s21
    %s25 = sphi 0, %s22
    %s26 = sphi 0, %s23
    %s27 = sphi 0, %s24
    %s28 = sphi 0, %s25
    %s44 = sphi 0, %s46
    %s47 = sphi 0, %s44
    %s48 = sphi 0, %s47
    %s64 = sphi 0, %s48
    %s80 = sphi 0, %s82
    %s83 = sphi 0, %s80
    %s84 = sphi 0, %s83
    %s100 = sphi 0, %s84
    %s104 = sphi 0, %s104
    %s106 = sphi 0, %s104
    %s107 = sphi 0, %s106
    %s121 = sphi 0, %s107
    %s125 = sphi 0, %s125
    %s127 = sphi 0, %s125
    %s128 = sphi 0, %s127
    %s142 = sphi 0, %s128
    %s146 = sphi 0, %s146
    %s148 = sphi 0, %s146
    %s149 = sphi 0, %s148
    %s163 = sphi 0, %s149
    %s167 = sphi 0, %s167
    %s169 = sphi 0, %s167
    %s170 = sphi 0, %s169
    %s184 = sphi 0, %s170
    %s190 = sphi 0, %s192
    %s193 = sphi 0, %s190
    %s194 = sphi 0, %s193
    %s210 = sphi 0, %s194
    %s220 = sphi 0, %s222
    %s223 = sphi 0, %s220
    %s224 = sphi 0, %s223
    %s240 = sphi 0, %s224
  $region4: #{_gcn_forward.1} parent=0 // loop_header_branch
    %16 = sbr.rel (%p14) target = $region8
  $region5: #{_gcn_forward.1} parent=0 // loop_body
    %s18 = ssub.s32 %s13, 1
    %s19 = ssub.s32 %s13, 2
    %s29 = sadd.s32 1, %s22
    %p30 = scmp.ge.s32.totalorder %s29, 1
    %s31 = scalar_select %p30, 0, %s29
    %s32 = sadd.s32 1, %s21
    %s33 = scalar_select %p30, %s32, %s21
    %p34 = scmp.ge.s32.totalorder %s33, 1
    %s35 = scalar_select %p34, 0, %s33
    %s36 = sadd.s32 1, %s20
    %s37 = scalar_select %p34, %s36, %s20
    %p38 = scmp.ge.s32.totalorder %s37, 2
    %s39 = scalar_select %p38, 0, %s37
    %s40 = ssub.s32 %s21, %s35
    %s41 = ssub.s32 %s22, %s31
    %s42 = sor.u32 %s40, %s41
    %p43 = scmp.eq.s32.totalorder %s42, 0
    %s45 = sadd.s32 %s44, 1
    %s46 = scalar_select %p43, %s44, %s45
    %p49 = pneg %p43
    %p50 = scmp.eq.s32.totalorder %s13, 1
    %p51 = por %p49, %p50
    %p52 = scmp.ne.s32.totalorder %s44, %s47
    %p53 = scmp.eq.s32.totalorder %s13, 0
    %p54 = por %p52, %p53
    %p55 = scmp.ne.s32.totalorder %s44, %s47
    %p56 = scmp.eq.s32.totalorder %s18, 1
    %p57 = por %p55, %p56
    %p58 = scmp.ne.s32.totalorder %s47, %s48
    %p59 = scmp.eq.s32.totalorder %s18, 0
    %p60 = por %p58, %p59
    %p61 = scmp.ne.s32.totalorder %s47, %s48
    %p62 = scmp.eq.s32.totalorder %s19, 1
    %p63 = por %p61, %p62
    %p65 = scmp.ne.s32.totalorder %s48, %s64
    %p66 = scmp.eq.s32.totalorder %s19, 0
    %p67 = por %p65, %p66
    %p68 = scmp.eq.s32.totalorder %s20, 0
    %p69 = scmp.eq.s32.totalorder %s21, 0
    %p70 = pnand %p68, %p69
    %p71 = pneg %p70
    %s72 = scalar_select %p71, %s22, 0
    %p73 = scmp.eq.s32.totalorder %s39, 0
    %p74 = scmp.eq.s32.totalorder %s35, 0
    %p75 = pnand %p73, %p74
    %p76 = pneg %p75
    %s77 = scalar_select %p76, %s31, 0
    %s78 = ssub.s32 %s72, %s77
    %p79 = scmp.eq.s32.totalorder %s78, 0
    %s81 = sadd.s32 %s80, 1
    %s82 = scalar_select %p79, %s80, %s81
    %p85 = pneg %p79
    %p86 = scmp.eq.s32.totalorder %s13, 1
    %p87 = por %p85, %p86
    %p88 = scmp.ne.s32.totalorder %s80, %s83
    %p89 = scmp.eq.s32.totalorder %s13, 0
    %p90 = por %p88, %p89
    %p91 = scmp.ne.s32.totalorder %s80, %s83
    %p92 = scmp.eq.s32.totalorder %s18, 1
    %p93 = por %p91, %p92
    %p94 = scmp.ne.s32.totalorder %s83, %s84
    %p95 = scmp.eq.s32.totalorder %s18, 0
    %p96 = por %p94, %p95
    %p97 = scmp.ne.s32.totalorder %s83, %s84
    %p98 = scmp.eq.s32.totalorder %s19, 1
    %p99 = por %p97, %p98
    %p101 = scmp.ne.s32.totalorder %s84, %s100
    %p102 = scmp.eq.s32.totalorder %s19, 0
    %p103 = por %p101, %p102
    %s105 = sadd.s32 %s104, 1
    %p108 = scmp.eq.s32.totalorder %s13, 1
    %p109 = scmp.ne.s32.totalorder %s104, %s106
    %p110 = scmp.eq.s32.totalorder %s13, 0
    %p111 = por %p109, %p110
    %p112 = scmp.ne.s32.totalorder %s104, %s106
    %p113 = scmp.eq.s32.totalorder %s18, 1
    %p114 = por %p112, %p113
    %p115 = scmp.ne.s32.totalorder %s106, %s107
    %p116 = scmp.eq.s32.totalorder %s18, 0
    %p117 = por %p115, %p116
    %p118 = scmp.ne.s32.totalorder %s106, %s107
    %p119 = scmp.eq.s32.totalorder %s19, 1
    %p120 = por %p118, %p119
    %p122 = scmp.ne.s32.totalorder %s107, %s121
    %p123 = scmp.eq.s32.totalorder %s19, 0
    %p124 = por %p122, %p123
    %s126 = sadd.s32 %s125, 1
    %p129 = scmp.eq.s32.totalorder %s13, 1
    %p130 = scmp.ne.s32.totalorder %s125, %s127
    %p131 = scmp.eq.s32.totalorder %s13, 0
    %p132 = por %p130, %p131
    %p133 = scmp.ne.s32.totalorder %s125, %s127
    %p134 = scmp.eq.s32.totalorder %s18, 1
    %p135 = por %p133, %p134
    %p136 = scmp.ne.s32.totalorder %s127, %s128
    %p137 = scmp.eq.s32.totalorder %s18, 0
    %p138 = por %p136, %p137
    %p139 = scmp.ne.s32.totalorder %s127, %s128
    %p140 = scmp.eq.s32.totalorder %s19, 1
    %p141 = por %p139, %p140
    %p143 = scmp.ne.s32.totalorder %s128, %s142
    %p144 = scmp.eq.s32.totalorder %s19, 0
    %p145 = por %p143, %p144
    %s147 = sadd.s32 %s146, 1
    %p150 = scmp.eq.s32.totalorder %s13, 1
    %p151 = scmp.ne.s32.totalorder %s146, %s148
    %p152 = scmp.eq.s32.totalorder %s13, 0
    %p153 = por %p151, %p152
    %p154 = scmp.ne.s32.totalorder %s146, %s148
    %p155 = scmp.eq.s32.totalorder %s18, 1
    %p156 = por %p154, %p155
    %p157 = scmp.ne.s32.totalorder %s148, %s149
    %p158 = scmp.eq.s32.totalorder %s18, 0
    %p159 = por %p157, %p158
    %p160 = scmp.ne.s32.totalorder %s148, %s149
    %p161 = scmp.eq.s32.totalorder %s19, 1
    %p162 = por %p160, %p161
    %p164 = scmp.ne.s32.totalorder %s149, %s163
    %p165 = scmp.eq.s32.totalorder %s19, 0
    %p166 = por %p164, %p165
    %s168 = sadd.s32 %s167, 1
    %p171 = scmp.eq.s32.totalorder %s13, 1
    %p172 = scmp.ne.s32.totalorder %s167, %s169
    %p173 = scmp.eq.s32.totalorder %s13, 0
    %p174 = por %p172, %p173
    %p175 = scmp.ne.s32.totalorder %s167, %s169
    %p176 = scmp.eq.s32.totalorder %s18, 1
    %p177 = por %p175, %p176
    %p178 = scmp.ne.s32.totalorder %s169, %s170
    %p179 = scmp.eq.s32.totalorder %s18, 0
    %p180 = por %p178, %p179
    %p181 = scmp.ne.s32.totalorder %s169, %s170
    %p182 = scmp.eq.s32.totalorder %s19, 1
    %p183 = por %p181, %p182
    %p185 = scmp.ne.s32.totalorder %s170, %s184
    %p186 = scmp.eq.s32.totalorder %s19, 0
    %p187 = por %p185, %p186
    %s188 = ssub.s32 %s21, %s35
    %p189 = scmp.eq.s32.totalorder %s188, 0
    %s191 = sadd.s32 %s190, 1
    %s192 = scalar_select %p189, %s190, %s191
    %p195 = pneg %p189
    %p196 = scmp.eq.s32.totalorder %s13, 1
    %p197 = por %p195, %p196
    %p198 = scmp.ne.s32.totalorder %s190, %s193
    %p199 = scmp.eq.s32.totalorder %s13, 0
    %p200 = por %p198, %p199
    %p201 = scmp.ne.s32.totalorder %s190, %s193
    %p202 = scmp.eq.s32.totalorder %s18, 1
    %p203 = por %p201, %p202
    %p204 = scmp.ne.s32.totalorder %s193, %s194
    %p205 = scmp.eq.s32.totalorder %s18, 0
    %p206 = por %p204, %p205
    %p207 = scmp.ne.s32.totalorder %s193, %s194
    %p208 = scmp.eq.s32.totalorder %s19, 1
    %p209 = por %p207, %p208
    %p211 = scmp.ne.s32.totalorder %s194, %s210
    %p212 = scmp.eq.s32.totalorder %s19, 0
    %p213 = por %p211, %p212
    %p214 = scmp.eq.s32.totalorder %s20, 1
    %s215 = scalar_select %p214, %s21, 0
    %p216 = scmp.eq.s32.totalorder %s39, 1
    %s217 = scalar_select %p216, %s35, 0
    %s218 = ssub.s32 %s215, %s217
    %p219 = scmp.eq.s32.totalorder %s218, 0
    %s221 = sadd.s32 %s220, 1
    %s222 = scalar_select %p219, %s220, %s221
    %p225 = pneg %p219
    %p226 = scmp.eq.s32.totalorder %s13, 1
    %p227 = por %p225, %p226
    %p228 = scmp.ne.s32.totalorder %s220, %s223
    %p229 = scmp.eq.s32.totalorder %s13, 0
    %p230 = por %p228, %p229
    %p231 = scmp.ne.s32.totalorder %s220, %s223
    %p232 = scmp.eq.s32.totalorder %s18, 1
    %p233 = por %p231, %p232
    %p234 = scmp.ne.s32.totalorder %s223, %s224
    %p235 = scmp.eq.s32.totalorder %s18, 0
    %p236 = por %p234, %p235
    %p237 = scmp.ne.s32.totalorder %s223, %s224
    %p238 = scmp.eq.s32.totalorder %s19, 1
    %p239 = por %p237, %p238
    %p241 = scmp.ne.s32.totalorder %s224, %s240
    %p242 = scmp.eq.s32.totalorder %s19, 0
    %p243 = por %p241, %p242
    %p244 = scmp.le.s32.totalorder 1, %s13
    %p245 = scmp.lt.s32.totalorder %s13, 3
    %p246 = pnand %p244, %p245
    %p247 = pneg %p246
    // Predicated region
    $region9: #{_gcn_forward.1} parent=5 // pred_check
      _
    $region10: #{_gcn_forward.1} parent=5 // pred_check_branch
      %249 = sbr.rel (%p246) target = $region12
    $region11: #{_gcn_forward.1} parent=5 // pred_region
      %s250 = ssub.s32 %s13, 1
      // Predicated region
      $region13: #{_gcn_forward.1} parent=11 // pred_check
        %p251 = pneg %p60
      $region14: #{_gcn_forward.1} parent=11 // pred_check_branch
        %253 = sbr.rel (%p251) target = $region16
      $region15: #{_gcn_forward.1} parent=11 // pred_region
        %s254 = smul.u32 16, %s24
        %p255 = scmp.lt.s32.totalorder %s254, 15
        %s256 = scalar_select %p255, %s254, 15
        %p257 = scmp.lt.s32.totalorder %s25, 0
        %s258 = scalar_select %p257, %s25, 0
        %s259 = sadd.s32 %s258, %s256
        %s260 = smul.addr %s259, 4
        %s261 = scalar_lea.vmem %s0, %s260
        %s262 = smul.u32 16, %s24
      $region16: #{_gcn_forward.1} parent=11 // pred_fallthru
        _
      // Predicated region
      $region17: #{_gcn_forward.1} parent=11 // pred_check
        %p263 = pneg %p117
      $region18: #{_gcn_forward.1} parent=11 // pred_check_branch
        %265 = sbr.rel (%p263) target = $region20
      $region19: #{_gcn_forward.1} parent=11 // pred_region
        _
      $region20: #{_gcn_forward.1} parent=11 // pred_fallthru
        _
      // Predicated region
      $region21: #{_gcn_forward.1} parent=11 // pred_check
        %p266 = pneg %p138
      $region22: #{_gcn_forward.1} parent=11 // pred_check_branch
        %268 = sbr.rel (%p266) target = $region24
      $region23: #{_gcn_forward.1} parent=11 // pred_region
        _
      $region24: #{_gcn_forward.1} parent=11 // pred_fallthru
        _
      // Predicated region
      $region25: #{_gcn_forward.1} parent=11 // pred_check
        %p269 = pneg %p159
      $region26: #{_gcn_forward.1} parent=11 // pred_check_branch
        %271 = sbr.rel (%p269) target = $region28
      $region27: #{_gcn_forward.1} parent=11 // pred_region
        _
      $region28: #{_gcn_forward.1} parent=11 // pred_fallthru
        _
      // Predicated region
      $region29: #{_gcn_forward.1} parent=11 // pred_check
        %p272 = pneg %p180
      $region30: #{_gcn_forward.1} parent=11 // pred_check_branch
        %274 = sbr.rel (%p272) target = $region32
      $region31: #{_gcn_forward.1} parent=11 // pred_region
        _
      $region32: #{_gcn_forward.1} parent=11 // pred_fallthru
        _
      // Predicated region
      $region33: #{_gcn_forward.1} parent=11 // pred_check
        %p275 = pneg %p206
      $region34: #{_gcn_forward.1} parent=11 // pred_check_branch
        %277 = sbr.rel (%p275) target = $region36
      $region35: #{_gcn_forward.1} parent=11 // pred_region
        %s278 = smul.u32 16, %s24
        %p279 = scmp.lt.s32.totalorder %s278, 15
        %s280 = scalar_select %p279, %s278, 15
        %s281 = smul.addr %s280, 8
        %s282 = scalar_lea.vmem %s6, %s281
        %s283 = smul.u32 16, %s24
      $region36: #{_gcn_forward.1} parent=11 // pred_fallthru
        _
    $region12: #{_gcn_forward.1} parent=5 // pred_fallthru
      _
    %p284 = scmp.lt.s32.totalorder %s13, 2
    // Predicated region
    $region37: #{_gcn_forward.1} parent=5 // pred_check
      %p285 = pneg %p284
    $region38: #{_gcn_forward.1} parent=5 // pred_check_branch
      %287 = sbr.rel (%p285) target = $region40
    $region39: #{_gcn_forward.1} parent=5 // pred_region
      // Predicated region
      $region41: #{_gcn_forward.1} parent=39 // pred_check
        %p288 = pneg %p90
      $region42: #{_gcn_forward.1} parent=39 // pred_check_branch
        %290 = sbr.rel (%p288) target = $region44
      $region43: #{_gcn_forward.1} parent=39 // pred_region
        %p291 = scmp.eq.s32.totalorder %s20, 0
        %p292 = scmp.eq.s32.totalorder %s21, 0
        %p293 = pnand %p291, %p292
        %p294 = pneg %p293
        %s295 = scalar_select %p294, %s22, 0
        %s296 = smul.u32 16, %s295
        %p297 = scmp.lt.s32.totalorder %s296, 15
        %s298 = scalar_select %p297, %s296, 15
        %s299 = smul.addr %s298, 4
        %s300 = scalar_lea.vmem %s1, %s299
        %p301 = scmp.eq.s32.totalorder %s20, 0
        %p302 = scmp.eq.s32.totalorder %s21, 0
        %p303 = pnand %p301, %p302
        %p304 = pneg %p303
        %s305 = scalar_select %p304, %s22, 0
        %s306 = smul.u32 16, %s305
      $region44: #{_gcn_forward.1} parent=39 // pred_fallthru
        _
    $region40: #{_gcn_forward.1} parent=5 // pred_fallthru
      _
    %p307 = scmp.le.s32.totalorder 1, %s13
    %p308 = scmp.lt.s32.totalorder %s13, 3
    %p309 = pnand %p307, %p308
    %p310 = pneg %p309
    // Predicated region
    $region45: #{_gcn_forward.1} parent=5 // pred_check
      _
    $region46: #{_gcn_forward.1} parent=5 // pred_check_branch
      %312 = sbr.rel (%p309) target = $region48
    $region47: #{_gcn_forward.1} parent=5 // pred_region
      %s313 = ssub.s32 %s13, 1
      %s314 = smul.u32 16, %s24
      %p315 = scmp.lt.s32.totalorder %s314, 15
      %s316 = scalar_select %p315, %s314, 15
      %p317 = scmp.lt.s32.totalorder %s25, 0
      %s318 = scalar_select %p317, %s25, 0
      %s319 = sadd.s32 %s318, %s316
      %s320 = smul.addr %s319, 4
      %s321 = scalar_lea.vmem %s0, %s320
      %p322 = pneg %p60
      %p323 = pneg %p57
      %p324 = scmp.eq.s32.totalorder %s23, 0
      %p325 = scmp.eq.s32.totalorder %s24, 0
      %p326 = pnand %p324, %p325
      %p327 = pneg %p326
      %s328 = scalar_select %p327, %s25, 0
      %s329 = smul.u32 16, %s328
      %p330 = scmp.lt.s32.totalorder %s329, 15
      %s331 = scalar_select %p330, %s329, 15
      %s332 = smul.addr %s331, 4
      %s333 = scalar_lea.vmem %s1, %s332
      %p334 = pneg %p96
      %p335 = pneg %p93
      %p336 = pneg %p117
      %p337 = pneg %p114
      %p338 = pneg %p138
      %p339 = pneg %p135
      %p340 = pneg %p159
      %p341 = pneg %p156
      %p342 = pneg %p180
      %p343 = pneg %p177
      %s344 = smul.u32 16, %s24
      %p345 = scmp.lt.s32.totalorder %s344, 15
      %s346 = scalar_select %p345, %s344, 15
      %s347 = smul.addr %s346, 8
      %s348 = scalar_lea.vmem %s6, %s347
      %p349 = pneg %p206
      %p350 = pneg %p203
      %p351 = pneg %p236
      %p352 = pneg %p233
      %p353 = scmp.eq.s32.totalorder %s23, 1
      %s354 = scalar_select %p353, %s24, 0
      %s355 = smul.u32 16, %s354
      %p356 = scmp.lt.s32.totalorder %s355, 15
      %s357 = scalar_select %p356, %s355, 15
      %s358 = smul.addr %s357, 8
      %s359 = scalar_lea.vmem %s7, %s358
      %s360 = smul.u32 16, %s24
      %p361 = scmp.lt.s32.totalorder %s360, 15
      %s362 = scalar_select %p361, %s360, 15
      %p363 = scmp.lt.s32.totalorder %s25, 0
      %s364 = scalar_select %p363, %s25, 0
      %s365 = sadd.s32 %s364, %s362
      %s366 = smul.addr %s365, 4
      %s367 = scalar_lea.vmem %s0, %s366
      %s368 = smul.u32 16, %s24
      %p369 = scmp.eq.s32.totalorder %s23, 0
      %p370 = scmp.eq.s32.totalorder %s24, 0
      %p371 = pnand %p369, %p370
      %p372 = pneg %p371
      %s373 = scalar_select %p372, %s25, 0
      %s374 = smul.u32 16, %s373
      %p375 = scmp.lt.s32.totalorder %s374, 15
      %s376 = scalar_select %p375, %s374, 15
      %s377 = smul.addr %s376, 4
      %s378 = scalar_lea.vmem %s1, %s377
      %p379 = scmp.eq.s32.totalorder %s23, 0
      %p380 = scmp.eq.s32.totalorder %s24, 0
      %p381 = pnand %p379, %p380
      %p382 = pneg %p381
      %s383 = scalar_select %p382, %s25, 0
      %s384 = smul.u32 16, %s383
      %s385 = smul.u32 16, %s24
      %p386 = scmp.lt.s32.totalorder %s385, 15
      %s387 = scalar_select %p386, %s385, 15
      %s388 = smul.addr %s387, 8
      %s389 = scalar_lea.vmem %s6, %s388
      %s390 = smul.u32 16, %s24
      %p391 = scmp.eq.s32.totalorder %s23, 1
      %s392 = scalar_select %p391, %s24, 0
      %s393 = smul.u32 16, %s392
      %p394 = scmp.lt.s32.totalorder %s393, 15
      %s395 = scalar_select %p394, %s393, 15
      %s396 = smul.addr %s395, 8
      %s397 = scalar_lea.vmem %s7, %s396
      %p398 = scmp.eq.s32.totalorder %s23, 1
      %s399 = scalar_select %p398, %s24, 0
      %s400 = smul.u32 16, %s399
      %s402 = smul.u32 %s25, 128
      %s403 = smul.u32 %s24, 128
      %p404 = scmp.eq.s32.totalorder %s23, 0
      %p405 = scmp.eq.s32.totalorder %s24, 0
      %p406 = pnand %p404, %p405
      %p407 = pneg %p406
      // Predicated region
      $region49: #{_gcn_forward.1} parent=47 // pred_check
        _
      $region50: #{_gcn_forward.1} parent=47 // pred_check_branch
        %409 = sbr.rel (%p406) target = $region52
      $region51: #{_gcn_forward.1} parent=47 // pred_region
        %v410 = vld [vmem:[%s378] sm:$0xf]
        %v411 = vld [vmem:[%s378 + $0x4] sm:$0xf]
        %v412 = vld [vmem:[%s378 + $0x8] sm:$0xf]
        %v413 = vld [vmem:[%s378 + $0xc] sm:$0xf]
        %v414 = vld [vmem:[%s378 + $0x10] sm:$0xf]
        %v415 = vld [vmem:[%s378 + $0x14] sm:$0xf]
        %v416 = vld [vmem:[%s378 + $0x18] sm:$0xf]
        %v417 = vld [vmem:[%s378 + $0x1c] sm:$0xf]
        %v418 = vld [vmem:[%s378 + $0x20] sm:$0xf]
        %v419 = vld [vmem:[%s378 + $0x24] sm:$0xf]
        %v420 = vld [vmem:[%s378 + $0x28] sm:$0xf]
        %v421 = vld [vmem:[%s378 + $0x2c] sm:$0xf]
        %v422 = vld [vmem:[%s378 + $0x30] sm:$0xf]
        %v423 = vld [vmem:[%s378 + $0x34] sm:$0xf]
        %v424 = vld [vmem:[%s378 + $0x38] sm:$0xf]
        %v425 = vld [vmem:[%s378 + $0x3c] sm:$0xf]
        %v426 = vld [vmem:[%s2] sm:$0xf]
        %v427 = vld [vmem:[%s2 + $0x4] sm:$0xf]
        %v428 = vld [vmem:[%s2 + $0x8] sm:$0xf]
        %v429 = vld [vmem:[%s2 + $0xc] sm:$0xf]
        %v430 = vld [vmem:[%s2 + $0x10] sm:$0xf]
        %v431 = vld [vmem:[%s2 + $0x14] sm:$0xf]
        %v432 = vld [vmem:[%s2 + $0x18] sm:$0xf]
        %v433 = vld [vmem:[%s2 + $0x1c] sm:$0xf]
        %v434 = vld [vmem:[%s2 + $0x20] sm:$0xf]
        %v435 = vld [vmem:[%s2 + $0x24] sm:$0xf]
        %v436 = vld [vmem:[%s2 + $0x28] sm:$0xf]
        %v437 = vld [vmem:[%s2 + $0x2c] sm:$0xf]
        %v438 = vld [vmem:[%s2 + $0x30] sm:$0xf]
        %v439 = vld [vmem:[%s2 + $0x34] sm:$0xf]
        %v440 = vld [vmem:[%s2 + $0x38] sm:$0xf]
        %v441 = vld [vmem:[%s2 + $0x3c] sm:$0xf]
        %v458 = vunpack.c.l.b16 %v410
        %v459 = vunpack.c.l.b16 %v411
        %v460 = vunpack.c.l.b16 %v412
        %v461 = vunpack.c.l.b16 %v413
        %v462 = vunpack.c.l.b16 %v414
        %v463 = vunpack.c.l.b16 %v415
        %v464 = vunpack.c.l.b16 %v416
        %v465 = vunpack.c.l.b16 %v417
        %v466 = vunpack.c.l.b16 %v418
        %v467 = vunpack.c.l.b16 %v419
        %v468 = vunpack.c.l.b16 %v420
        %v469 = vunpack.c.l.b16 %v421
        %v470 = vunpack.c.l.b16 %v422
        %v471 = vunpack.c.l.b16 %v423
        %v472 = vunpack.c.l.b16 %v424
        %v473 = vunpack.c.l.b16 %v425
        %v474 = vpack.c.b16 %v459, %v458
        %v475 = vpack.c.b16 %v461, %v460
        %v476 = vpack.c.b16 %v463, %v462
        %v477 = vpack.c.b16 %v465, %v464
        %v478 = vpack.c.b16 %v467, %v466
        %v479 = vpack.c.b16 %v469, %v468
        %v480 = vpack.c.b16 %v471, %v470
        %v481 = vpack.c.b16 %v473, %v472
        %v506 = vunpack.c.l.b16 %v426
        %v507 = vunpack.c.l.b16 %v427
        %v508 = vunpack.c.l.b16 %v428
        %v509 = vunpack.c.l.b16 %v429
        %v510 = vunpack.c.l.b16 %v430
        %v511 = vunpack.c.l.b16 %v431
        %v512 = vunpack.c.l.b16 %v432
        %v513 = vunpack.c.l.b16 %v433
        %v514 = vunpack.c.l.b16 %v434
        %v515 = vunpack.c.l.b16 %v435
        %v516 = vunpack.c.l.b16 %v436
        %v517 = vunpack.c.l.b16 %v437
        %v518 = vunpack.c.l.b16 %v438
        %v519 = vunpack.c.l.b16 %v439
        %v520 = vunpack.c.l.b16 %v440
        %v521 = vunpack.c.l.b16 %v441
        %v522 = vpack.c.b16 %v507, %v506
        %v523 = vpack.c.b16 %v509, %v508
        %v524 = vpack.c.b16 %v511, %v510
        %v525 = vpack.c.b16 %v513, %v512
        %v526 = vpack.c.b16 %v515, %v514
        %v527 = vpack.c.b16 %v517, %v516
        %v528 = vpack.c.b16 %v519, %v518
        %v529 = vpack.c.b16 %v521, %v520
        %538 = vmatprep.subr.bf16.mxu0 0
        %539 = vmatpush1.bf16.msra.mxu0 %v522
        %540 = vmatprep.subr.bf16.mxu0 0
        %541 = vmatpush1.bf16.msra.mxu0 %v523
        %542 = vmatprep.subr.bf16.mxu0 0
        %543 = vmatpush1.bf16.msra.mxu0 %v524
        %544 = vmatprep.subr.bf16.mxu0 0
        %545 = vmatpush1.bf16.msra.mxu0 %v525
        %546 = vmatprep.subr.bf16.mxu0 0
        %547 = vmatpush1.bf16.msra.mxu0 %v526
        %548 = vmatprep.subr.bf16.mxu0 0
        %549 = vmatpush1.bf16.msra.mxu0 %v527
        %550 = vmatprep.subr.bf16.mxu0 0
        %551 = vmatpush1.bf16.msra.mxu0 %v528
        %552 = vmatprep.subr.bf16.mxu0 0
        %553 = vmatpush1.bf16.msra.mxu0 %v529
        %554 = vmatprep.subr.bf16.mxu0 0
        %555 = vmatpush1.bf16.msra.mxu0 0
        %556 = vmatprep.subr.bf16.mxu0 0
        %557 = vmatpush1.bf16.msra.mxu0 0
        %558 = vmatprep.subr.bf16.mxu0 0
        %559 = vmatpush1.bf16.msra.mxu0 0
        %560 = vmatprep.subr.bf16.mxu0 0
        %561 = vmatpush1.bf16.msra.mxu0 0
        %562 = vmatprep.subr.bf16.mxu0 0
        %563 = vmatpush1.bf16.msra.mxu0 0
        %564 = vmatprep.subr.bf16.mxu0 0
        %565 = vmatpush1.bf16.msra.mxu0 0
        %566 = vmatprep.subr.bf16.mxu0 0
        %567 = vmatpush1.bf16.msra.mxu0 0
        %568 = vmatprep.subr.bf16.mxu0 0
        %569 = vmatpush1.bf16.msra.mxu0 0
        %570 = vmatprep.mubr.bf16.mxu0 0
        %571 = vmatmul.mubr.bf16.gmra.mrb[0].mxu0 %v474
        %v572 = vpop.f32.mrb[0].mxu0
        %v573 = vadd.f32 0.0, %v572
        %v574 = vpop.f32.mrb[0].mxu0
        %v575 = vpop.f32.mrb[0].mxu0
        %v576 = vadd.f32 0.0, %v575
        %v577 = vpop.f32.mrb[0].mxu0
        %578 = vmatprep.mubr.bf16.mxu0 0
        %579 = vmatmul.mubr.bf16.gmra.mrb[0].mxu0 %v475
        %v580 = vpop.f32.mrb[0].mxu0
        %v581 = vadd.f32 0.0, %v580
        %v582 = vpop.f32.mrb[0].mxu0
        %v583 = vpop.f32.mrb[0].mxu0
        %v584 = vadd.f32 0.0, %v583
        %v585 = vpop.f32.mrb[0].mxu0
        %586 = vmatprep.mubr.bf16.mxu0 0
        %587 = vmatmul.mubr.bf16.gmra.mrb[0].mxu0 %v476
        %v588 = vpop.f32.mrb[0].mxu0
        %v589 = vadd.f32 0.0, %v588
        %v590 = vpop.f32.mrb[0].mxu0
        %v591 = vpop.f32.mrb[0].mxu0
        %v592 = vadd.f32 0.0, %v591
        %v593 = vpop.f32.mrb[0].mxu0
        %594 = vmatprep.mubr.bf16.mxu0 0
        %595 = vmatmul.mubr.bf16.gmra.mrb[0].mxu0 %v477
        %v596 = vpop.f32.mrb[0].mxu0
        %v597 = vadd.f32 0.0, %v596
        %v598 = vpop.f32.mrb[0].mxu0
        %v599 = vpop.f32.mrb[0].mxu0
        %v600 = vadd.f32 0.0, %v599
        %v601 = vpop.f32.mrb[0].mxu0
        %602 = vmatprep.mubr.bf16.mxu0 0
        %603 = vmatmul.mubr.bf16.gmra.mrb[0].mxu0 %v478
        %v604 = vpop.f32.mrb[0].mxu0
        %v605 = vadd.f32 0.0, %v604
        %v606 = vpop.f32.mrb[0].mxu0
        %v607 = vpop.f32.mrb[0].mxu0
        %v608 = vadd.f32 0.0, %v607
        %v609 = vpop.f32.mrb[0].mxu0
        %610 = vmatprep.mubr.bf16.mxu0 0
        %611 = vmatmul.mubr.bf16.gmra.mrb[0].mxu0 %v479
        %v612 = vpop.f32.mrb[0].mxu0
        %v613 = vadd.f32 0.0, %v612
        %v614 = vpop.f32.mrb[0].mxu0
        %v615 = vpop.f32.mrb[0].mxu0
        %v616 = vadd.f32 0.0, %v615
        %v617 = vpop.f32.mrb[0].mxu0
        %618 = vmatprep.mubr.bf16.mxu0 0
        %619 = vmatmul.mubr.bf16.gmra.mrb[0].mxu0 %v480
        %v620 = vpop.f32.mrb[0].mxu0
        %v621 = vadd.f32 0.0, %v620
        %v622 = vpop.f32.mrb[0].mxu0
        %v623 = vpop.f32.mrb[0].mxu0
        %v624 = vadd.f32 0.0, %v623
        %v625 = vpop.f32.mrb[0].mxu0
        %626 = vmatprep.mubr.bf16.mxu0 0
        %627 = vmatmul.mubr.bf16.gmra.mrb[0].mxu0 %v481
        %v628 = vpop.f32.mrb[0].mxu0
        %v629 = vadd.f32 0.0, %v628
        %v630 = vpop.f32.mrb[0].mxu0
        %v631 = vpop.f32.mrb[0].mxu0
        %v632 = vadd.f32 0.0, %v631
        %v633 = vpop.f32.mrb[0].mxu0
        %634 = vdwg.mxu0
        %v635 = vpack.c.bf16 %v576, %v573
        %v636 = vpack.c.bf16 %v584, %v581
        %v637 = vpack.c.bf16 %v592, %v589
        %v638 = vpack.c.bf16 %v600, %v597
        %v639 = vpack.c.bf16 %v608, %v605
        %v640 = vpack.c.bf16 %v616, %v613
        %v641 = vpack.c.bf16 %v624, %v621
        %v642 = vpack.c.bf16 %v632, %v629
        %s643 = sshra.s32 %s402, 4
        %s644 = sand.u32 %s402, 15
        %s645 = smul.addr %s643, 8
        %s646 = scalar_lea.vmem [#allocation2], %s645
        %647 = vst [vmem:[%s646] sm:$0xff] %v635
        %648 = vst [vmem:[%s646 + $0x8] sm:$0xff] %v636
        %649 = vst [vmem:[%s646 + $0x10] sm:$0xff] %v637
        %650 = vst [vmem:[%s646 + $0x18] sm:$0xff] %v638
        %651 = vst [vmem:[%s646 + $0x20] sm:$0xff] %v639
        %652 = vst [vmem:[%s646 + $0x28] sm:$0xff] %v640
        %653 = vst [vmem:[%s646 + $0x30] sm:$0xff] %v641
        %654 = vst [vmem:[%s646 + $0x38] sm:$0xff] %v642
      $region52: #{_gcn_forward.1} parent=47 // pred_fallthru
        _
      %p655 = scmp.eq.s32.totalorder %s25, 0
      // Predicated region
      $region53: #{_gcn_forward.1} parent=47 // pred_check
        %p656 = pneg %p655
      $region54: #{_gcn_forward.1} parent=47 // pred_check_branch
        %658 = sbr.rel (%p656) target = $region56
      $region55: #{_gcn_forward.1} parent=47 // pred_region
        %659 = vst [vmem:[#allocation4] sm:$0xff] 0.0
        %660 = vst [vmem:[#allocation4 + $0x8] sm:$0xff] 0.0
        %661 = vst [vmem:[#allocation4 + $0x10] sm:$0xff] 0.0
        %662 = vst [vmem:[#allocation4 + $0x18] sm:$0xff] 0.0
        %663 = vst [vmem:[#allocation4 + $0x20] sm:$0xff] 0.0
        %664 = vst [vmem:[#allocation4 + $0x28] sm:$0xff] 0.0
        %665 = vst [vmem:[#allocation4 + $0x30] sm:$0xff] 0.0
        %666 = vst [vmem:[#allocation4 + $0x38] sm:$0xff] 0.0
        %667 = vst [vmem:[#allocation4 + $0x40] sm:$0xff] 0.0
        %668 = vst [vmem:[#allocation4 + $0x48] sm:$0xff] 0.0
        %669 = vst [vmem:[#allocation4 + $0x50] sm:$0xff] 0.0
        %670 = vst [vmem:[#allocation4 + $0x58] sm:$0xff] 0.0
        %671 = vst [vmem:[#allocation4 + $0x60] sm:$0xff] 0.0
        %672 = vst [vmem:[#allocation4 + $0x68] sm:$0xff] 0.0
        %673 = vst [vmem:[#allocation4 + $0x70] sm:$0xff] 0.0
        %674 = vst [vmem:[#allocation4 + $0x78] sm:$0xff] 0.0
      $region56: #{_gcn_forward.1} parent=47 // pred_fallthru
        _
      // Predicated region
      $region57: #{_gcn_forward.1} parent=47 // pred_check
        %p675 = pneg %p404
      $region58: #{_gcn_forward.1} parent=47 // pred_check_branch
        %677 = sbr.rel (%p675) target = $region60
      $region59: #{_gcn_forward.1} parent=47 // pred_region
        %v678 = vld [vmem:[#allocation4] sm:$0xff]
        %v679 = vld [vmem:[#allocation4 + $0x8] sm:$0xff]
        %v680 = vld [vmem:[#allocation4 + $0x10] sm:$0xff]
        %v681 = vld [vmem:[#allocation4 + $0x18] sm:$0xff]
        %v682 = vld [vmem:[#allocation4 + $0x20] sm:$0xff]
        %v683 = vld [vmem:[#allocation4 + $0x28] sm:$0xff]
        %v684 = vld [vmem:[#allocation4 + $0x30] sm:$0xff]
        %v685 = vld [vmem:[#allocation4 + $0x38] sm:$0xff]
        %v686 = vld [vmem:[#allocation4 + $0x40] sm:$0xff]
        %v687 = vld [vmem:[#allocation4 + $0x48] sm:$0xff]
        %v688 = vld [vmem:[#allocation4 + $0x50] sm:$0xff]
        %v689 = vld [vmem:[#allocation4 + $0x58] sm:$0xff]
        %v690 = vld [vmem:[#allocation4 + $0x60] sm:$0xff]
        %v691 = vld [vmem:[#allocation4 + $0x68] sm:$0xff]
        %v692 = vld [vmem:[#allocation4 + $0x70] sm:$0xff]
        %v693 = vld [vmem:[#allocation4 + $0x78] sm:$0xff]
        %v694 = vld [vmem:[%s367] sm:$0xf]
        %v695 = vld [vmem:[%s367 + $0x4] sm:$0xf]
        %v696 = vld [vmem:[%s367 + $0x8] sm:$0xf]
        %v697 = vld [vmem:[%s367 + $0xc] sm:$0xf]
        %v698 = vld [vmem:[%s367 + $0x10] sm:$0xf]
        %v699 = vld [vmem:[%s367 + $0x14] sm:$0xf]
        %v700 = vld [vmem:[%s367 + $0x18] sm:$0xf]
        %v701 = vld [vmem:[%s367 + $0x1c] sm:$0xf]
        %v702 = vld [vmem:[%s367 + $0x20] sm:$0xf]
        %v703 = vld [vmem:[%s367 + $0x24] sm:$0xf]
        %v704 = vld [vmem:[%s367 + $0x28] sm:$0xf]
        %v705 = vld [vmem:[%s367 + $0x2c] sm:$0xf]
        %v706 = vld [vmem:[%s367 + $0x30] sm:$0xf]
        %v707 = vld [vmem:[%s367 + $0x34] sm:$0xf]
        %v708 = vld [vmem:[%s367 + $0x38] sm:$0xf]
        %v709 = vld [vmem:[%s367 + $0x3c] sm:$0xf]
        %s710 = sshra.s32 %s402, 4
        %s711 = sand.u32 %s402, 15
        %s712 = smul.addr %s710, 8
        %s713 = scalar_lea.vmem [#allocation2], %s712
        %v714 = vld [vmem:[%s713] sm:$0xff]
        %v715 = vld [vmem:[%s713 + $0x8] sm:$0xff]
        %v716 = vld [vmem:[%s713 + $0x10] sm:$0xff]
        %v717 = vld [vmem:[%s713 + $0x18] sm:$0xff]
        %v718 = vld [vmem:[%s713 + $0x20] sm:$0xff]
        %v719 = vld [vmem:[%s713 + $0x28] sm:$0xff]
        %v720 = vld [vmem:[%s713 + $0x30] sm:$0xff]
        %v721 = vld [vmem:[%s713 + $0x38] sm:$0xff]
        %v738 = vunpack.c.l.b16 %v694
        %v739 = vunpack.c.l.b16 %v695
        %v740 = vunpack.c.l.b16 %v696
        %v741 = vunpack.c.l.b16 %v697
        %v742 = vunpack.c.l.b16 %v698
        %v743 = vunpack.c.l.b16 %v699
        %v744 = vunpack.c.l.b16 %v700
        %v745 = vunpack.c.l.b16 %v701
        %v746 = vunpack.c.l.b16 %v702
        %v747 = vunpack.c.l.b16 %v703
        %v748 = vunpack.c.l.b16 %v704
        %v749 = vunpack.c.l.b16 %v705
        %v750 = vunpack.c.l.b16 %v706
        %v751 = vunpack.c.l.b16 %v707
        %v752 = vunpack.c.l.b16 %v708
        %v753 = vunpack.c.l.b16 %v709
        %v754 = vpack.c.b16 %v739, %v738
        %v755 = vpack.c.b16 %v741, %v740
        %v756 = vpack.c.b16 %v743, %v742
        %v757 = vpack.c.b16 %v745, %v744
        %v758 = vpack.c.b16 %v747, %v746
        %v759 = vpack.c.b16 %v749, %v748
        %v760 = vpack.c.b16 %v751, %v750
        %v761 = vpack.c.b16 %v753, %v752
        %770 = vmatprep.subr.bf16.mxu0 0
        %771 = vmatpush1.bf16.msra.mxu0 %v714
        %772 = vmatprep.subr.bf16.mxu0 0
        %773 = vmatpush1.bf16.msra.mxu0 %v715
        %774 = vmatprep.subr.bf16.mxu0 0
        %775 = vmatpush1.bf16.msra.mxu0 %v716
        %776 = vmatprep.subr.bf16.mxu0 0
        %777 = vmatpush1.bf16.msra.mxu0 %v717
        %778 = vmatprep.subr.bf16.mxu0 0
        %779 = vmatpush1.bf16.msra.mxu0 %v718
        %780 = vmatprep.subr.bf16.mxu0 0
        %781 = vmatpush1.bf16.msra.mxu0 %v719
        %782 = vmatprep.subr.bf16.mxu0 0
        %783 = vmatpush1.bf16.msra.mxu0 %v720
        %784 = vmatprep.subr.bf16.mxu0 0
        %785 = vmatpush1.bf16.msra.mxu0 %v721
        %786 = vmatprep.subr.bf16.mxu0 0
        %787 = vmatpush1.bf16.msra.mxu0 0
        %788 = vmatprep.subr.bf16.mxu0 0
        %789 = vmatpush1.bf16.msra.mxu0 0
        %790 = vmatprep.subr.bf16.mxu0 0
        %791 = vmatpush1.bf16.msra.mxu0 0
        %792 = vmatprep.subr.bf16.mxu0 0
        %793 = vmatpush1.bf16.msra.mxu0 0
        %794 = vmatprep.subr.bf16.mxu0 0
        %795 = vmatpush1.bf16.msra.mxu0 0
        %796 = vmatprep.subr.bf16.mxu0 0
        %797 = vmatpush1.bf16.msra.mxu0 0
        %798 = vmatprep.subr.bf16.mxu0 0
        %799 = vmatpush1.bf16.msra.mxu0 0
        %800 = vmatprep.subr.bf16.mxu0 0
        %801 = vmatpush1.bf16.msra.mxu0 0
        %802 = vmatprep.mubr.bf16.mxu0 0
        %803 = vmatmul.mubr.bf16.gmra.mrb[0].mxu0 %v754
        %v804 = vpop.f32.mrb[0].mxu0
        %v805 = vadd.f32 0.0, %v804
        %v806 = vpop.f32.mrb[0].mxu0
        %v807 = vpop.f32.mrb[0].mxu0
        %v808 = vadd.f32 0.0, %v807
        %v809 = vpop.f32.mrb[0].mxu0
        %810 = vmatprep.mubr.bf16.mxu0 0
        %811 = vmatmul.mubr.bf16.gmra.mrb[0].mxu0 %v755
        %v812 = vpop.f32.mrb[0].mxu0
        %v813 = vadd.f32 0.0, %v812
        %v814 = vpop.f32.mrb[0].mxu0
        %v815 = vpop.f32.mrb[0].mxu0
        %v816 = vadd.f32 0.0, %v815
        %v817 = vpop.f32.mrb[0].mxu0
        %818 = vmatprep.mubr.bf16.mxu0 0
        %819 = vmatmul.mubr.bf16.gmra.mrb[0].mxu0 %v756
        %v820 = vpop.f32.mrb[0].mxu0
        %v821 = vadd.f32 0.0, %v820
        %v822 = vpop.f32.mrb[0].mxu0
        %v823 = vpop.f32.mrb[0].mxu0
        %v824 = vadd.f32 0.0, %v823
        %v825 = vpop.f32.mrb[0].mxu0
        %826 = vmatprep.mubr.bf16.mxu0 0
        %827 = vmatmul.mubr.bf16.gmra.mrb[0].mxu0 %v757
        %v828 = vpop.f32.mrb[0].mxu0
        %v829 = vadd.f32 0.0, %v828
        %v830 = vpop.f32.mrb[0].mxu0
        %v831 = vpop.f32.mrb[0].mxu0
        %v832 = vadd.f32 0.0, %v831
        %v833 = vpop.f32.mrb[0].mxu0
        %834 = vmatprep.mubr.bf16.mxu0 0
        %835 = vmatmul.mubr.bf16.gmra.mrb[0].mxu0 %v758
        %v836 = vpop.f32.mrb[0].mxu0
        %v837 = vadd.f32 0.0, %v836
        %v838 = vpop.f32.mrb[0].mxu0
        %v839 = vpop.f32.mrb[0].mxu0
        %v840 = vadd.f32 0.0, %v839
        %v841 = vpop.f32.mrb[0].mxu0
        %842 = vmatprep.mubr.bf16.mxu0 0
        %843 = vmatmul.mubr.bf16.gmra.mrb[0].mxu0 %v759
        %v844 = vpop.f32.mrb[0].mxu0
        %v845 = vadd.f32 0.0, %v844
        %v846 = vpop.f32.mrb[0].mxu0
        %v847 = vpop.f32.mrb[0].mxu0
        %v848 = vadd.f32 0.0, %v847
        %v849 = vpop.f32.mrb[0].mxu0
        %850 = vmatprep.mubr.bf16.mxu0 0
        %851 = vmatmul.mubr.bf16.gmra.mrb[0].mxu0 %v760
        %v852 = vpop.f32.mrb[0].mxu0
        %v853 = vadd.f32 0.0, %v852
        %v854 = vpop.f32.mrb[0].mxu0
        %v855 = vpop.f32.mrb[0].mxu0
        %v856 = vadd.f32 0.0, %v855
        %v857 = vpop.f32.mrb[0].mxu0
        %858 = vmatprep.mubr.bf16.mxu0 0
        %859 = vmatmul.mubr.bf16.gmra.mrb[0].mxu0 %v761
        %v860 = vpop.f32.mrb[0].mxu0
        %v861 = vadd.f32 0.0, %v860
        %v862 = vpop.f32.mrb[0].mxu0
        %v863 = vpop.f32.mrb[0].mxu0
        %v864 = vadd.f32 0.0, %v863
        %v865 = vpop.f32.mrb[0].mxu0
        %866 = vdwg.mxu0
        %v867 = vadd.f32 %v678, %v805
        %v868 = vadd.f32 %v679, %v808
        %v869 = vadd.f32 %v680, %v813
        %v870 = vadd.f32 %v681, %v816
        %v871 = vadd.f32 %v682, %v821
        %v872 = vadd.f32 %v683, %v824
        %v873 = vadd.f32 %v684, %v829
        %v874 = vadd.f32 %v685, %v832
        %v875 = vadd.f32 %v686, %v837
        %v876 = vadd.f32 %v687, %v840
        %v877 = vadd.f32 %v688, %v845
        %v878 = vadd.f32 %v689, %v848
        %v879 = vadd.f32 %v690, %v853
        %v880 = vadd.f32 %v691, %v856
        %v881 = vadd.f32 %v692, %v861
        %v882 = vadd.f32 %v693, %v864
        %883 = vst [vmem:[#allocation4] sm:$0xff] %v867
        %884 = vst [vmem:[#allocation4 + $0x8] sm:$0xff] %v868
        %885 = vst [vmem:[#allocation4 + $0x10] sm:$0xff] %v869
        %886 = vst [vmem:[#allocation4 + $0x18] sm:$0xff] %v870
        %887 = vst [vmem:[#allocation4 + $0x20] sm:$0xff] %v871
        %888 = vst [vmem:[#allocation4 + $0x28] sm:$0xff] %v872
        %889 = vst [vmem:[#allocation4 + $0x30] sm:$0xff] %v873
        %890 = vst [vmem:[#allocation4 + $0x38] sm:$0xff] %v874
        %891 = vst [vmem:[#allocation4 + $0x40] sm:$0xff] %v875
        %892 = vst [vmem:[#allocation4 + $0x48] sm:$0xff] %v876
        %893 = vst [vmem:[#allocation4 + $0x50] sm:$0xff] %v877
        %894 = vst [vmem:[#allocation4 + $0x58] sm:$0xff] %v878
        %895 = vst [vmem:[#allocation4 + $0x60] sm:$0xff] %v879
        %896 = vst [vmem:[#allocation4 + $0x68] sm:$0xff] %v880
        %897 = vst [vmem:[#allocation4 + $0x70] sm:$0xff] %v881
        %898 = vst [vmem:[#allocation4 + $0x78] sm:$0xff] %v882
      $region60: #{_gcn_forward.1} parent=47 // pred_fallthru
        _
      %p899 = scmp.eq.s32.totalorder %s23, 1
      // Predicated region
      $region61: #{_gcn_forward.1} parent=47 // pred_check
        %p900 = pneg %p899
      $region62: #{_gcn_forward.1} parent=47 // pred_check_branch
        %902 = sbr.rel (%p900) target = $region64
      $region63: #{_gcn_forward.1} parent=47 // pred_region
        %v903 = vld [vmem:[#allocation4] sm:$0xff]
        %v904 = vld [vmem:[#allocation4 + $0x8] sm:$0xff]
        %v905 = vld [vmem:[#allocation4 + $0x10] sm:$0xff]
        %v906 = vld [vmem:[#allocation4 + $0x18] sm:$0xff]
        %v907 = vld [vmem:[#allocation4 + $0x20] sm:$0xff]
        %v908 = vld [vmem:[#allocation4 + $0x28] sm:$0xff]
        %v909 = vld [vmem:[#allocation4 + $0x30] sm:$0xff]
        %v910 = vld [vmem:[#allocation4 + $0x38] sm:$0xff]
        %v911 = vld [vmem:[#allocation4 + $0x40] sm:$0xff]
        %v912 = vld [vmem:[#allocation4 + $0x48] sm:$0xff]
        %v913 = vld [vmem:[#allocation4 + $0x50] sm:$0xff]
        %v914 = vld [vmem:[#allocation4 + $0x58] sm:$0xff]
        %v915 = vld [vmem:[#allocation4 + $0x60] sm:$0xff]
        %v916 = vld [vmem:[#allocation4 + $0x68] sm:$0xff]
        %v917 = vld [vmem:[#allocation4 + $0x70] sm:$0xff]
        %v918 = vld [vmem:[#allocation4 + $0x78] sm:$0xff]
        %v919 = vld [vmem:[%s367] sm:$0xf]
        %v920 = vld [vmem:[%s367 + $0x4] sm:$0xf]
        %v921 = vld [vmem:[%s367 + $0x8] sm:$0xf]
        %v922 = vld [vmem:[%s367 + $0xc] sm:$0xf]
        %v923 = vld [vmem:[%s367 + $0x10] sm:$0xf]
        %v924 = vld [vmem:[%s367 + $0x14] sm:$0xf]
        %v925 = vld [vmem:[%s367 + $0x18] sm:$0xf]
        %v926 = vld [vmem:[%s367 + $0x1c] sm:$0xf]
        %v927 = vld [vmem:[%s367 + $0x20] sm:$0xf]
        %v928 = vld [vmem:[%s367 + $0x24] sm:$0xf]
        %v929 = vld [vmem:[%s367 + $0x28] sm:$0xf]
        %v930 = vld [vmem:[%s367 + $0x2c] sm:$0xf]
        %v931 = vld [vmem:[%s367 + $0x30] sm:$0xf]
        %v932 = vld [vmem:[%s367 + $0x34] sm:$0xf]
        %v933 = vld [vmem:[%s367 + $0x38] sm:$0xf]
        %v934 = vld [vmem:[%s367 + $0x3c] sm:$0xf]
        %s935 = sshra.s32 %s402, 4
        %s936 = sand.u32 %s402, 15
        %s937 = smul.addr %s935, 8
        %s938 = scalar_lea.vmem [#allocation3], %s937
        %v939 = vld [vmem:[%s938] sm:$0xff]
        %v940 = vld [vmem:[%s938 + $0x8] sm:$0xff]
        %v941 = vld [vmem:[%s938 + $0x10] sm:$0xff]
        %v942 = vld [vmem:[%s938 + $0x18] sm:$0xff]
        %v943 = vld [vmem:[%s938 + $0x20] sm:$0xff]
        %v944 = vld [vmem:[%s938 + $0x28] sm:$0xff]
        %v945 = vld [vmem:[%s938 + $0x30] sm:$0xff]
        %v946 = vld [vmem:[%s938 + $0x38] sm:$0xff]
        %v963 = vunpack.c.l.b16 %v919
        %v964 = vunpack.c.l.b16 %v920
        %v965 = vunpack.c.l.b16 %v921
        %v966 = vunpack.c.l.b16 %v922
        %v967 = vunpack.c.l.b16 %v923
        %v968 = vunpack.c.l.b16 %v924
        %v969 = vunpack.c.l.b16 %v925
        %v970 = vunpack.c.l.b16 %v926
        %v971 = vunpack.c.l.b16 %v927
        %v972 = vunpack.c.l.b16 %v928
        %v973 = vunpack.c.l.b16 %v929
        %v974 = vunpack.c.l.b16 %v930
        %v975 = vunpack.c.l.b16 %v931
        %v976 = vunpack.c.l.b16 %v932
        %v977 = vunpack.c.l.b16 %v933
        %v978 = vunpack.c.l.b16 %v934
        %v979 = vpack.c.b16 %v964, %v963
        %v980 = vpack.c.b16 %v966, %v965
        %v981 = vpack.c.b16 %v968, %v967
        %v982 = vpack.c.b16 %v970, %v969
        %v983 = vpack.c.b16 %v972, %v971
        %v984 = vpack.c.b16 %v974, %v973
        %v985 = vpack.c.b16 %v976, %v975
        %v986 = vpack.c.b16 %v978, %v977
        %995 = vmatprep.subr.bf16.mxu0 0
        %996 = vmatpush1.bf16.msra.mxu0 %v939
        %997 = vmatprep.subr.bf16.mxu0 0
        %998 = vmatpush1.bf16.msra.mxu0 %v940
        %999 = vmatprep.subr.bf16.mxu0 0
        %1000 = vmatpush1.bf16.msra.mxu0 %v941
        %1001 = vmatprep.subr.bf16.mxu0 0
        %1002 = vmatpush1.bf16.msra.mxu0 %v942
        %1003 = vmatprep.subr.bf16.mxu0 0
        %1004 = vmatpush1.bf16.msra.mxu0 %v943
        %1005 = vmatprep.subr.bf16.mxu0 0
        %1006 = vmatpush1.bf16.msra.mxu0 %v944
        %1007 = vmatprep.subr.bf16.mxu0 0
        %1008 = vmatpush1.bf16.msra.mxu0 %v945
        %1009 = vmatprep.subr.bf16.mxu0 0
        %1010 = vmatpush1.bf16.msra.mxu0 %v946
        %1011 = vmatprep.subr.bf16.mxu0 0
        %1012 = vmatpush1.bf16.msra.mxu0 0
        %1013 = vmatprep.subr.bf16.mxu0 0
        %1014 = vmatpush1.bf16.msra.mxu0 0
        %1015 = vmatprep.subr.bf16.mxu0 0
        %1016 = vmatpush1.bf16.msra.mxu0 0
        %1017 = vmatprep.subr.bf16.mxu0 0
        %1018 = vmatpush1.bf16.msra.mxu0 0
        %1019 = vmatprep.subr.bf16.mxu0 0
        %1020 = vmatpush1.bf16.msra.mxu0 0
        %1021 = vmatprep.subr.bf16.mxu0 0
        %1022 = vmatpush1.bf16.msra.mxu0 0
        %1023 = vmatprep.subr.bf16.mxu0 0
        %1024 = vmatpush1.bf16.msra.mxu0 0
        %1025 = vmatprep.subr.bf16.mxu0 0
        %1026 = vmatpush1.bf16.msra.mxu0 0
        %1027 = vmatprep.mubr.bf16.mxu0 0
        %1028 = vmatmul.mubr.bf16.gmra.mrb[0].mxu0 %v979
        %v1029 = vpop.f32.mrb[0].mxu0
        %v1030 = vadd.f32 0.0, %v1029
        %v1031 = vpop.f32.mrb[0].mxu0
        %v1032 = vpop.f32.mrb[0].mxu0
        %v1033 = vadd.f32 0.0, %v1032
        %v1034 = vpop.f32.mrb[0].mxu0
        %1035 = vmatprep.mubr.bf16.mxu0 0
        %1036 = vmatmul.mubr.bf16.gmra.mrb[0].mxu0 %v980
        %v1037 = vpop.f32.mrb[0].mxu0
        %v1038 = vadd.f32 0.0, %v1037
        %v1039 = vpop.f32.mrb[0].mxu0
        %v1040 = vpop.f32.mrb[0].mxu0
        %v1041 = vadd.f32 0.0, %v1040
        %v1042 = vpop.f32.mrb[0].mxu0
        %1043 = vmatprep.mubr.bf16.mxu0 0
        %1044 = vmatmul.mubr.bf16.gmra.mrb[0].mxu0 %v981
        %v1045 = vpop.f32.mrb[0].mxu0
        %v1046 = vadd.f32 0.0, %v1045
        %v1047 = vpop.f32.mrb[0].mxu0
        %v1048 = vpop.f32.mrb[0].mxu0
        %v1049 = vadd.f32 0.0, %v1048
        %v1050 = vpop.f32.mrb[0].mxu0
        %1051 = vmatprep.mubr.bf16.mxu0 0
        %1052 = vmatmul.mubr.bf16.gmra.mrb[0].mxu0 %v982
        %v1053 = vpop.f32.mrb[0].mxu0
        %v1054 = vadd.f32 0.0, %v1053
        %v1055 = vpop.f32.mrb[0].mxu0
        %v1056 = vpop.f32.mrb[0].mxu0
        %v1057 = vadd.f32 0.0, %v1056
        %v1058 = vpop.f32.mrb[0].mxu0
        %1059 = vmatprep.mubr.bf16.mxu0 0
        %1060 = vmatmul.mubr.bf16.gmra.mrb[0].mxu0 %v983
        %v1061 = vpop.f32.mrb[0].mxu0
        %v1062 = vadd.f32 0.0, %v1061
        %v1063 = vpop.f32.mrb[0].mxu0
        %v1064 = vpop.f32.mrb[0].mxu0
        %v1065 = vadd.f32 0.0, %v1064
        %v1066 = vpop.f32.mrb[0].mxu0
        %1067 = vmatprep.mubr.bf16.mxu0 0
        %1068 = vmatmul.mubr.bf16.gmra.mrb[0].mxu0 %v984
        %v1069 = vpop.f32.mrb[0].mxu0
        %v1070 = vadd.f32 0.0, %v1069
        %v1071 = vpop.f32.mrb[0].mxu0
        %v1072 = vpop.f32.mrb[0].mxu0
        %v1073 = vadd.f32 0.0, %v1072
        %v1074 = vpop.f32.mrb[0].mxu0
        %1075 = vmatprep.mubr.bf16.mxu0 0
        %1076 = vmatmul.mubr.bf16.gmra.mrb[0].mxu0 %v985
        %v1077 = vpop.f32.mrb[0].mxu0
        %v1078 = vadd.f32 0.0, %v1077
        %v1079 = vpop.f32.mrb[0].mxu0
        %v1080 = vpop.f32.mrb[0].mxu0
        %v1081 = vadd.f32 0.0, %v1080
        %v1082 = vpop.f32.mrb[0].mxu0
        %1083 = vmatprep.mubr.bf16.mxu0 0
        %1084 = vmatmul.mubr.bf16.gmra.mrb[0].mxu0 %v986
        %v1085 = vpop.f32.mrb[0].mxu0
        %v1086 = vadd.f32 0.0, %v1085
        %v1087 = vpop.f32.mrb[0].mxu0
        %v1088 = vpop.f32.mrb[0].mxu0
        %v1089 = vadd.f32 0.0, %v1088
        %v1090 = vpop.f32.mrb[0].mxu0
        %1091 = vdwg.mxu0
        %v1092 = vadd.f32 %v903, %v1030
        %v1093 = vadd.f32 %v904, %v1033
        %v1094 = vadd.f32 %v905, %v1038
        %v1095 = vadd.f32 %v906, %v1041
        %v1096 = vadd.f32 %v907, %v1046
        %v1097 = vadd.f32 %v908, %v1049
        %v1098 = vadd.f32 %v909, %v1054
        %v1099 = vadd.f32 %v910, %v1057
        %v1100 = vadd.f32 %v911, %v1062
        %v1101 = vadd.f32 %v912, %v1065
        %v1102 = vadd.f32 %v913, %v1070
        %v1103 = vadd.f32 %v914, %v1073
        %v1104 = vadd.f32 %v915, %v1078
        %v1105 = vadd.f32 %v916, %v1081
        %v1106 = vadd.f32 %v917, %v1086
        %v1107 = vadd.f32 %v918, %v1089
        %1108 = vst [vmem:[#allocation4] sm:$0xff] %v1092
        %1109 = vst [vmem:[#allocation4 + $0x8] sm:$0xff] %v1093
        %1110 = vst [vmem:[#allocation4 + $0x10] sm:$0xff] %v1094
        %1111 = vst [vmem:[#allocation4 + $0x18] sm:$0xff] %v1095
        %1112 = vst [vmem:[#allocation4 + $0x20] sm:$0xff] %v1096
        %1113 = vst [vmem:[#allocation4 + $0x28] sm:$0xff] %v1097
        %1114 = vst [vmem:[#allocation4 + $0x30] sm:$0xff] %v1098
        %1115 = vst [vmem:[#allocation4 + $0x38] sm:$0xff] %v1099
        %1116 = vst [vmem:[#allocation4 + $0x40] sm:$0xff] %v1100
        %1117 = vst [vmem:[#allocation4 + $0x48] sm:$0xff] %v1101
        %1118 = vst [vmem:[#allocation4 + $0x50] sm:$0xff] %v1102
        %1119 = vst [vmem:[#allocation4 + $0x58] sm:$0xff] %v1103
        %1120 = vst [vmem:[#allocation4 + $0x60] sm:$0xff] %v1104
        %1121 = vst [vmem:[#allocation4 + $0x68] sm:$0xff] %v1105
        %1122 = vst [vmem:[#allocation4 + $0x70] sm:$0xff] %v1106
        %1123 = vst [vmem:[#allocation4 + $0x78] sm:$0xff] %v1107
      $region64: #{_gcn_forward.1} parent=47 // pred_fallthru
        _
      %p1124 = pnand %p655, %p404
      %p1125 = pneg %p1124
      // Predicated region
      $region65: #{_gcn_forward.1} parent=47 // pred_check
        _
      $region66: #{_gcn_forward.1} parent=47 // pred_check_branch
        %1127 = sbr.rel (%p1124) target = $region68
      $region67: #{_gcn_forward.1} parent=47 // pred_region
        %v1128 = vld [vmem:[%s389] sm:$0xff]
        %v1129 = vld [vmem:[%s389 + $0x8] sm:$0xff]
        %v1130 = vld [vmem:[%s389 + $0x10] sm:$0xff]
        %v1131 = vld [vmem:[%s389 + $0x18] sm:$0xff]
        %v1132 = vld [vmem:[%s389 + $0x20] sm:$0xff]
        %v1133 = vld [vmem:[%s389 + $0x28] sm:$0xff]
        %v1134 = vld [vmem:[%s389 + $0x30] sm:$0xff]
        %v1135 = vld [vmem:[%s389 + $0x38] sm:$0xff]
        %v1136 = vld [vmem:[%s389 + $0x40] sm:$0xff]
        %v1137 = vld [vmem:[%s389 + $0x48] sm:$0xff]
        %v1138 = vld [vmem:[%s389 + $0x50] sm:$0xff]
        %v1139 = vld [vmem:[%s389 + $0x58] sm:$0xff]
        %v1140 = vld [vmem:[%s389 + $0x60] sm:$0xff]
        %v1141 = vld [vmem:[%s389 + $0x68] sm:$0xff]
        %v1142 = vld [vmem:[%s389 + $0x70] sm:$0xff]
        %v1143 = vld [vmem:[%s389 + $0x78] sm:$0xff]
        %v1144 = vld [vmem:[#allocation4] sm:$0xff]
        %v1145 = vld [vmem:[#allocation4 + $0x8] sm:$0xff]
        %v1146 = vld [vmem:[#allocation4 + $0x10] sm:$0xff]
        %v1147 = vld [vmem:[#allocation4 + $0x18] sm:$0xff]
        %v1148 = vld [vmem:[#allocation4 + $0x20] sm:$0xff]
        %v1149 = vld [vmem:[#allocation4 + $0x28] sm:$0xff]
        %v1150 = vld [vmem:[#allocation4 + $0x30] sm:$0xff]
        %v1151 = vld [vmem:[#allocation4 + $0x38] sm:$0xff]
        %v1152 = vld [vmem:[#allocation4 + $0x40] sm:$0xff]
        %v1153 = vld [vmem:[#allocation4 + $0x48] sm:$0xff]
        %v1154 = vld [vmem:[#allocation4 + $0x50] sm:$0xff]
        %v1155 = vld [vmem:[#allocation4 + $0x58] sm:$0xff]
        %v1156 = vld [vmem:[#allocation4 + $0x60] sm:$0xff]
        %v1157 = vld [vmem:[#allocation4 + $0x68] sm:$0xff]
        %v1158 = vld [vmem:[#allocation4 + $0x70] sm:$0xff]
        %v1159 = vld [vmem:[#allocation4 + $0x78] sm:$0xff]
        %1161 = vset.pattern.permute.xlu0 0
        %1162 = vperm.xlu0 %1161, %v1128
        %v1163 = vpop.permute.xlu0 %1162
        %1166 = vset.pattern.permute.xlu0 0
        %1167 = vperm.xlu0 %1166, %v1129
        %v1168 = vpop.permute.xlu0 %1167
        %1171 = vset.pattern.permute.xlu0 0
        %1172 = vperm.xlu0 %1171, %v1130
        %v1173 = vpop.permute.xlu0 %1172
        %1176 = vset.pattern.permute.xlu0 0
        %1177 = vperm.xlu0 %1176, %v1131
        %v1178 = vpop.permute.xlu0 %1177
        %1181 = vset.pattern.permute.xlu0 0
        %1182 = vperm.xlu0 %1181, %v1132
        %v1183 = vpop.permute.xlu0 %1182
        %1186 = vset.pattern.permute.xlu0 0
        %1187 = vperm.xlu0 %1186, %v1133
        %v1188 = vpop.permute.xlu0 %1187
        %1191 = vset.pattern.permute.xlu0 0
        %1192 = vperm.xlu0 %1191, %v1134
        %v1193 = vpop.permute.xlu0 %1192
        %1196 = vset.pattern.permute.xlu0 0
        %1197 = vperm.xlu0 %1196, %v1135
        %v1198 = vpop.permute.xlu0 %1197
        %1201 = vset.pattern.permute.xlu0 0
        %1202 = vperm.xlu0 %1201, %v1136
        %v1203 = vpop.permute.xlu0 %1202
        %1206 = vset.pattern.permute.xlu0 0
        %1207 = vperm.xlu0 %1206, %v1137
        %v1208 = vpop.permute.xlu0 %1207
        %1211 = vset.pattern.permute.xlu0 0
        %1212 = vperm.xlu0 %1211, %v1138
        %v1213 = vpop.permute.xlu0 %1212
        %1216 = vset.pattern.permute.xlu0 0
        %1217 = vperm.xlu0 %1216, %v1139
        %v1218 = vpop.permute.xlu0 %1217
        %1221 = vset.pattern.permute.xlu0 0
        %1222 = vperm.xlu0 %1221, %v1140
        %v1223 = vpop.permute.xlu0 %1222
        %1226 = vset.pattern.permute.xlu0 0
        %1227 = vperm.xlu0 %1226, %v1141
        %v1228 = vpop.permute.xlu0 %1227
        %1231 = vset.pattern.permute.xlu0 0
        %1232 = vperm.xlu0 %1231, %v1142
        %v1233 = vpop.permute.xlu0 %1232
        %1236 = vset.pattern.permute.xlu0 0
        %1237 = vperm.xlu0 %1236, %v1143
        %v1238 = vpop.permute.xlu0 %1237
        %v1240 = vmul.f32 %v1144, %v1163
        %v1241 = vmul.f32 %v1145, %v1168
        %v1242 = vmul.f32 %v1146, %v1173
        %v1243 = vmul.f32 %v1147, %v1178
        %v1244 = vmul.f32 %v1148, %v1183
        %v1245 = vmul.f32 %v1149, %v1188
        %v1246 = vmul.f32 %v1150, %v1193
        %v1247 = vmul.f32 %v1151, %v1198
        %v1248 = vmul.f32 %v1152, %v1203
        %v1249 = vmul.f32 %v1153, %v1208
        %v1250 = vmul.f32 %v1154, %v1213
        %v1251 = vmul.f32 %v1155, %v1218
        %v1252 = vmul.f32 %v1156, %v1223
        %v1253 = vmul.f32 %v1157, %v1228
        %v1254 = vmul.f32 %v1158, %v1233
        %v1255 = vmul.f32 %v1159, %v1238
        %v1256 = vld [vmem:[%s3] sm:$0x1]
        %v1258 = vlaneseq
        %v1259 = vshrl.u32 %v1258, 7
        %v1260 = vsub.s32 0, %v1259
        %v1261 = vrot.slane %v1256, %v1260
        %v1263 = vadd.f32 %v1240, %v1261
        %v1264 = vadd.f32 %v1241, %v1261
        %v1265 = vadd.f32 %v1242, %v1261
        %v1266 = vadd.f32 %v1243, %v1261
        %v1267 = vadd.f32 %v1244, %v1261
        %v1268 = vadd.f32 %v1245, %v1261
        %v1269 = vadd.f32 %v1246, %v1261
        %v1270 = vadd.f32 %v1247, %v1261
        %v1271 = vadd.f32 %v1248, %v1261
        %v1272 = vadd.f32 %v1249, %v1261
        %v1273 = vadd.f32 %v1250, %v1261
        %v1274 = vadd.f32 %v1251, %v1261
        %v1275 = vadd.f32 %v1252, %v1261
        %v1276 = vadd.f32 %v1253, %v1261
        %v1277 = vadd.f32 %v1254, %v1261
        %v1278 = vadd.f32 %v1255, %v1261
        %v1279 = vmax.f32 %v1263, 0.0
        %v1280 = vmax.f32 %v1264, 0.0
        %v1281 = vmax.f32 %v1265, 0.0
        %v1282 = vmax.f32 %v1266, 0.0
        %v1283 = vmax.f32 %v1267, 0.0
        %v1284 = vmax.f32 %v1268, 0.0
        %v1285 = vmax.f32 %v1269, 0.0
        %v1286 = vmax.f32 %v1270, 0.0
        %v1287 = vmax.f32 %v1271, 0.0
        %v1288 = vmax.f32 %v1272, 0.0
        %v1289 = vmax.f32 %v1273, 0.0
        %v1290 = vmax.f32 %v1274, 0.0
        %v1291 = vmax.f32 %v1275, 0.0
        %v1292 = vmax.f32 %v1276, 0.0
        %v1293 = vmax.f32 %v1277, 0.0
        %v1294 = vmax.f32 %v1278, 0.0
        %v1295 = vpack.c.bf16 %v1280, %v1279
        %v1296 = vpack.c.bf16 %v1282, %v1281
        %v1297 = vpack.c.bf16 %v1284, %v1283
        %v1298 = vpack.c.bf16 %v1286, %v1285
        %v1299 = vpack.c.bf16 %v1288, %v1287
        %v1300 = vpack.c.bf16 %v1290, %v1289
        %v1301 = vpack.c.bf16 %v1292, %v1291
        %v1302 = vpack.c.bf16 %v1294, %v1293
        %v1303 = vld [vmem:[%s4] sm:$0xf]
        %v1304 = vld [vmem:[%s4 + $0x4] sm:$0xf]
        %v1305 = vld [vmem:[%s4 + $0x8] sm:$0xf]
        %v1306 = vld [vmem:[%s4 + $0xc] sm:$0xf]
        %v1307 = vld [vmem:[%s4 + $0x10] sm:$0xf]
        %v1308 = vld [vmem:[%s4 + $0x14] sm:$0xf]
        %v1309 = vld [vmem:[%s4 + $0x18] sm:$0xf]
        %v1310 = vld [vmem:[%s4 + $0x1c] sm:$0xf]
        %v1311 = vld [vmem:[%s4 + $0x20] sm:$0xf]
        %v1312 = vld [vmem:[%s4 + $0x24] sm:$0xf]
        %v1313 = vld [vmem:[%s4 + $0x28] sm:$0xf]
        %v1314 = vld [vmem:[%s4 + $0x2c] sm:$0xf]
        %v1315 = vld [vmem:[%s4 + $0x30] sm:$0xf]
        %v1316 = vld [vmem:[%s4 + $0x34] sm:$0xf]
        %v1317 = vld [vmem:[%s4 + $0x38] sm:$0xf]
        %v1318 = vld [vmem:[%s4 + $0x3c] sm:$0xf]
        %v1335 = vunpack.c.l.b16 %v1303
        %v1336 = vunpack.c.l.b16 %v1304
        %v1337 = vunpack.c.l.b16 %v1305
        %v1338 = vunpack.c.l.b16 %v1306
        %v1339 = vunpack.c.l.b16 %v1307
        %v1340 = vunpack.c.l.b16 %v1308
        %v1341 = vunpack.c.l.b16 %v1309
        %v1342 = vunpack.c.l.b16 %v1310
        %v1343 = vunpack.c.l.b16 %v1311
        %v1344 = vunpack.c.l.b16 %v1312
        %v1345 = vunpack.c.l.b16 %v1313
        %v1346 = vunpack.c.l.b16 %v1314
        %v1347 = vunpack.c.l.b16 %v1315
        %v1348 = vunpack.c.l.b16 %v1316
        %v1349 = vunpack.c.l.b16 %v1317
        %v1350 = vunpack.c.l.b16 %v1318
        %v1351 = vpack.c.b16 %v1336, %v1335
        %v1352 = vpack.c.b16 %v1338, %v1337
        %v1353 = vpack.c.b16 %v1340, %v1339
        %v1354 = vpack.c.b16 %v1342, %v1341
        %v1355 = vpack.c.b16 %v1344, %v1343
        %v1356 = vpack.c.b16 %v1346, %v1345
        %v1357 = vpack.c.b16 %v1348, %v1347
        %v1358 = vpack.c.b16 %v1350, %v1349
        %1367 = vmatprep.subr.bf16.mxu0 0
        %1368 = vmatpush1.bf16.msra.mxu0 %v1351
        %1369 = vmatprep.subr.bf16.mxu0 0
        %1370 = vmatpush1.bf16.msra.mxu0 %v1352
        %1371 = vmatprep.subr.bf16.mxu0 0
        %1372 = vmatpush1.bf16.msra.mxu0 %v1353
        %1373 = vmatprep.subr.bf16.mxu0 0
        %1374 = vmatpush1.bf16.msra.mxu0 %v1354
        %1375 = vmatprep.subr.bf16.mxu0 0
        %1376 = vmatpush1.bf16.msra.mxu0 %v1355
        %1377 = vmatprep.subr.bf16.mxu0 0
        %1378 = vmatpush1.bf16.msra.mxu0 %v1356
        %1379 = vmatprep.subr.bf16.mxu0 0
        %1380 = vmatpush1.bf16.msra.mxu0 %v1357
        %1381 = vmatprep.subr.bf16.mxu0 0
        %1382 = vmatpush1.bf16.msra.mxu0 %v1358
        %1383 = vmatprep.subr.bf16.mxu0 0
        %1384 = vmatpush1.bf16.msra.mxu0 0
        %1385 = vmatprep.subr.bf16.mxu0 0
        %1386 = vmatpush1.bf16.msra.mxu0 0
        %1387 = vmatprep.subr.bf16.mxu0 0
        %1388 = vmatpush1.bf16.msra.mxu0 0
        %1389 = vmatprep.subr.bf16.mxu0 0
        %1390 = vmatpush1.bf16.msra.mxu0 0
        %1391 = vmatprep.subr.bf16.mxu0 0
        %1392 = vmatpush1.bf16.msra.mxu0 0
        %1393 = vmatprep.subr.bf16.mxu0 0
        %1394 = vmatpush1.bf16.msra.mxu0 0
        %1395 = vmatprep.subr.bf16.mxu0 0
        %1396 = vmatpush1.bf16.msra.mxu0 0
        %1397 = vmatprep.subr.bf16.mxu0 0
        %1398 = vmatpush1.bf16.msra.mxu0 0
        %1399 = vmatprep.mubr.bf16.mxu0 0
        %1400 = vmatmul.mubr.bf16.gmra.mrb[0].mxu0 %v1295
        %v1401 = vpop.f32.mrb[0].mxu0
        %v1402 = vadd.f32 0.0, %v1401
        %v1403 = vpop.f32.mrb[0].mxu0
        %v1404 = vpop.f32.mrb[0].mxu0
        %v1405 = vadd.f32 0.0, %v1404
        %v1406 = vpop.f32.mrb[0].mxu0
        %1407 = vmatprep.mubr.bf16.mxu0 0
        %1408 = vmatmul.mubr.bf16.gmra.mrb[0].mxu0 %v1296
        %v1409 = vpop.f32.mrb[0].mxu0
        %v1410 = vadd.f32 0.0, %v1409
        %v1411 = vpop.f32.mrb[0].mxu0
        %v1412 = vpop.f32.mrb[0].mxu0
        %v1413 = vadd.f32 0.0, %v1412
        %v1414 = vpop.f32.mrb[0].mxu0
        %1415 = vmatprep.mubr.bf16.mxu0 0
        %1416 = vmatmul.mubr.bf16.gmra.mrb[0].mxu0 %v1297
        %v1417 = vpop.f32.mrb[0].mxu0
        %v1418 = vadd.f32 0.0, %v1417
        %v1419 = vpop.f32.mrb[0].mxu0
        %v1420 = vpop.f32.mrb[0].mxu0
        %v1421 = vadd.f32 0.0, %v1420
        %v1422 = vpop.f32.mrb[0].mxu0
        %1423 = vmatprep.mubr.bf16.mxu0 0
        %1424 = vmatmul.mubr.bf16.gmra.mrb[0].mxu0 %v1298
        %v1425 = vpop.f32.mrb[0].mxu0
        %v1426 = vadd.f32 0.0, %v1425
        %v1427 = vpop.f32.mrb[0].mxu0
        %v1428 = vpop.f32.mrb[0].mxu0
        %v1429 = vadd.f32 0.0, %v1428
        %v1430 = vpop.f32.mrb[0].mxu0
        %1431 = vmatprep.mubr.bf16.mxu0 0
        %1432 = vmatmul.mubr.bf16.gmra.mrb[0].mxu0 %v1299
        %v1433 = vpop.f32.mrb[0].mxu0
        %v1434 = vadd.f32 0.0, %v1433
        %v1435 = vpop.f32.mrb[0].mxu0
        %v1436 = vpop.f32.mrb[0].mxu0
        %v1437 = vadd.f32 0.0, %v1436
        %v1438 = vpop.f32.mrb[0].mxu0
        %1439 = vmatprep.mubr.bf16.mxu0 0
        %1440 = vmatmul.mubr.bf16.gmra.mrb[0].mxu0 %v1300
        %v1441 = vpop.f32.mrb[0].mxu0
        %v1442 = vadd.f32 0.0, %v1441
        %v1443 = vpop.f32.mrb[0].mxu0
        %v1444 = vpop.f32.mrb[0].mxu0
        %v1445 = vadd.f32 0.0, %v1444
        %v1446 = vpop.f32.mrb[0].mxu0
        %1447 = vmatprep.mubr.bf16.mxu0 0
        %1448 = vmatmul.mubr.bf16.gmra.mrb[0].mxu0 %v1301
        %v1449 = vpop.f32.mrb[0].mxu0
        %v1450 = vadd.f32 0.0, %v1449
        %v1451 = vpop.f32.mrb[0].mxu0
        %v1452 = vpop.f32.mrb[0].mxu0
        %v1453 = vadd.f32 0.0, %v1452
        %v1454 = vpop.f32.mrb[0].mxu0
        %1455 = vmatprep.mubr.bf16.mxu0 0
        %1456 = vmatmul.mubr.bf16.gmra.mrb[0].mxu0 %v1302
        %v1457 = vpop.f32.mrb[0].mxu0
        %v1458 = vadd.f32 0.0, %v1457
        %v1459 = vpop.f32.mrb[0].mxu0
        %v1460 = vpop.f32.mrb[0].mxu0
        %v1461 = vadd.f32 0.0, %v1460
        %v1462 = vpop.f32.mrb[0].mxu0
        %1463 = vdwg.mxu0
        %v1464 = vmul.f32 %v1402, %v1163
        %v1465 = vmul.f32 %v1405, %v1168
        %v1466 = vmul.f32 %v1410, %v1173
        %v1467 = vmul.f32 %v1413, %v1178
        %v1468 = vmul.f32 %v1418, %v1183
        %v1469 = vmul.f32 %v1421, %v1188
        %v1470 = vmul.f32 %v1426, %v1193
        %v1471 = vmul.f32 %v1429, %v1198
        %v1472 = vmul.f32 %v1434, %v1203
        %v1473 = vmul.f32 %v1437, %v1208
        %v1474 = vmul.f32 %v1442, %v1213
        %v1475 = vmul.f32 %v1445, %v1218
        %v1476 = vmul.f32 %v1450, %v1223
        %v1477 = vmul.f32 %v1453, %v1228
        %v1478 = vmul.f32 %v1458, %v1233
        %v1479 = vmul.f32 %v1461, %v1238
        %v1480 = vpack.c.bf16 %v1465, %v1464
        %v1481 = vpack.c.bf16 %v1467, %v1466
        %v1482 = vpack.c.bf16 %v1469, %v1468
        %v1483 = vpack.c.bf16 %v1471, %v1470
        %v1484 = vpack.c.bf16 %v1473, %v1472
        %v1485 = vpack.c.bf16 %v1475, %v1474
        %v1486 = vpack.c.bf16 %v1477, %v1476
        %v1487 = vpack.c.bf16 %v1479, %v1478
        %s1488 = sshra.s32 %s403, 4
        %s1489 = sand.u32 %s403, 15
        %s1490 = smul.addr %s1488, 8
        %s1491 = scalar_lea.vmem [#allocation3], %s1490
        %1492 = vst [vmem:[%s1491] sm:$0xff] %v1480
        %1493 = vst [vmem:[%s1491 + $0x8] sm:$0xff] %v1481
        %1494 = vst [vmem:[%s1491 + $0x10] sm:$0xff] %v1482
        %1495 = vst [vmem:[%s1491 + $0x18] sm:$0xff] %v1483
        %1496 = vst [vmem:[%s1491 + $0x20] sm:$0xff] %v1484
        %1497 = vst [vmem:[%s1491 + $0x28] sm:$0xff] %v1485
        %1498 = vst [vmem:[%s1491 + $0x30] sm:$0xff] %v1486
        %1499 = vst [vmem:[%s1491 + $0x38] sm:$0xff] %v1487
      $region68: #{_gcn_forward.1} parent=47 // pred_fallthru
        _
      %p1500 = pnand %p655, %p899
      %p1501 = pneg %p1500
      // Predicated region
      $region69: #{_gcn_forward.1} parent=47 // pred_check
        _
      $region70: #{_gcn_forward.1} parent=47 // pred_check_branch
        %1503 = sbr.rel (%p1500) target = $region72
      $region71: #{_gcn_forward.1} parent=47 // pred_region
        %v1504 = vld [vmem:[%s389] sm:$0xff]
        %v1505 = vld [vmem:[%s389 + $0x8] sm:$0xff]
        %v1506 = vld [vmem:[%s389 + $0x10] sm:$0xff]
        %v1507 = vld [vmem:[%s389 + $0x18] sm:$0xff]
        %v1508 = vld [vmem:[%s389 + $0x20] sm:$0xff]
        %v1509 = vld [vmem:[%s389 + $0x28] sm:$0xff]
        %v1510 = vld [vmem:[%s389 + $0x30] sm:$0xff]
        %v1511 = vld [vmem:[%s389 + $0x38] sm:$0xff]
        %v1512 = vld [vmem:[%s389 + $0x40] sm:$0xff]
        %v1513 = vld [vmem:[%s389 + $0x48] sm:$0xff]
        %v1514 = vld [vmem:[%s389 + $0x50] sm:$0xff]
        %v1515 = vld [vmem:[%s389 + $0x58] sm:$0xff]
        %v1516 = vld [vmem:[%s389 + $0x60] sm:$0xff]
        %v1517 = vld [vmem:[%s389 + $0x68] sm:$0xff]
        %v1518 = vld [vmem:[%s389 + $0x70] sm:$0xff]
        %v1519 = vld [vmem:[%s389 + $0x78] sm:$0xff]
        %v1520 = vld [vmem:[#allocation4] sm:$0xff]
        %v1521 = vld [vmem:[#allocation4 + $0x8] sm:$0xff]
        %v1522 = vld [vmem:[#allocation4 + $0x10] sm:$0xff]
        %v1523 = vld [vmem:[#allocation4 + $0x18] sm:$0xff]
        %v1524 = vld [vmem:[#allocation4 + $0x20] sm:$0xff]
        %v1525 = vld [vmem:[#allocation4 + $0x28] sm:$0xff]
        %v1526 = vld [vmem:[#allocation4 + $0x30] sm:$0xff]
        %v1527 = vld [vmem:[#allocation4 + $0x38] sm:$0xff]
        %v1528 = vld [vmem:[#allocation4 + $0x40] sm:$0xff]
        %v1529 = vld [vmem:[#allocation4 + $0x48] sm:$0xff]
        %v1530 = vld [vmem:[#allocation4 + $0x50] sm:$0xff]
        %v1531 = vld [vmem:[#allocation4 + $0x58] sm:$0xff]
        %v1532 = vld [vmem:[#allocation4 + $0x60] sm:$0xff]
        %v1533 = vld [vmem:[#allocation4 + $0x68] sm:$0xff]
        %v1534 = vld [vmem:[#allocation4 + $0x70] sm:$0xff]
        %v1535 = vld [vmem:[#allocation4 + $0x78] sm:$0xff]
        %1537 = vset.pattern.permute.xlu0 0
        %1538 = vperm.xlu0 %1537, %v1504
        %v1539 = vpop.permute.xlu0 %1538
        %1542 = vset.pattern.permute.xlu0 0
        %1543 = vperm.xlu0 %1542, %v1505
        %v1544 = vpop.permute.xlu0 %1543
        %1547 = vset.pattern.permute.xlu0 0
        %1548 = vperm.xlu0 %1547, %v1506
        %v1549 = vpop.permute.xlu0 %1548
        %1552 = vset.pattern.permute.xlu0 0
        %1553 = vperm.xlu0 %1552, %v1507
        %v1554 = vpop.permute.xlu0 %1553
        %1557 = vset.pattern.permute.xlu0 0
        %1558 = vperm.xlu0 %1557, %v1508
        %v1559 = vpop.permute.xlu0 %1558
        %1562 = vset.pattern.permute.xlu0 0
        %1563 = vperm.xlu0 %1562, %v1509
        %v1564 = vpop.permute.xlu0 %1563
        %1567 = vset.pattern.permute.xlu0 0
        %1568 = vperm.xlu0 %1567, %v1510
        %v1569 = vpop.permute.xlu0 %1568
        %1572 = vset.pattern.permute.xlu0 0
        %1573 = vperm.xlu0 %1572, %v1511
        %v1574 = vpop.permute.xlu0 %1573
        %1577 = vset.pattern.permute.xlu0 0
        %1578 = vperm.xlu0 %1577, %v1512
        %v1579 = vpop.permute.xlu0 %1578
        %1582 = vset.pattern.permute.xlu0 0
        %1583 = vperm.xlu0 %1582, %v1513
        %v1584 = vpop.permute.xlu0 %1583
        %1587 = vset.pattern.permute.xlu0 0
        %1588 = vperm.xlu0 %1587, %v1514
        %v1589 = vpop.permute.xlu0 %1588
        %1592 = vset.pattern.permute.xlu0 0
        %1593 = vperm.xlu0 %1592, %v1515
        %v1594 = vpop.permute.xlu0 %1593
        %1597 = vset.pattern.permute.xlu0 0
        %1598 = vperm.xlu0 %1597, %v1516
        %v1599 = vpop.permute.xlu0 %1598
        %1602 = vset.pattern.permute.xlu0 0
        %1603 = vperm.xlu0 %1602, %v1517
        %v1604 = vpop.permute.xlu0 %1603
        %1607 = vset.pattern.permute.xlu0 0
        %1608 = vperm.xlu0 %1607, %v1518
        %v1609 = vpop.permute.xlu0 %1608
        %1612 = vset.pattern.permute.xlu0 0
        %1613 = vperm.xlu0 %1612, %v1519
        %v1614 = vpop.permute.xlu0 %1613
        %v1616 = vmul.f32 %v1520, %v1539
        %v1617 = vmul.f32 %v1521, %v1544
        %v1618 = vmul.f32 %v1522, %v1549
        %v1619 = vmul.f32 %v1523, %v1554
        %v1620 = vmul.f32 %v1524, %v1559
        %v1621 = vmul.f32 %v1525, %v1564
        %v1622 = vmul.f32 %v1526, %v1569
        %v1623 = vmul.f32 %v1527, %v1574
        %v1624 = vmul.f32 %v1528, %v1579
        %v1625 = vmul.f32 %v1529, %v1584
        %v1626 = vmul.f32 %v1530, %v1589
        %v1627 = vmul.f32 %v1531, %v1594
        %v1628 = vmul.f32 %v1532, %v1599
        %v1629 = vmul.f32 %v1533, %v1604
        %v1630 = vmul.f32 %v1534, %v1609
        %v1631 = vmul.f32 %v1535, %v1614
        %v1632 = vld [vmem:[%s5] sm:$0x1]
        %v1634 = vlaneseq
        %v1635 = vshrl.u32 %v1634, 7
        %v1636 = vsub.s32 0, %v1635
        %v1637 = vrot.slane %v1632, %v1636
        %v1639 = vadd.f32 %v1616, %v1637
        %v1640 = vadd.f32 %v1617, %v1637
        %v1641 = vadd.f32 %v1618, %v1637
        %v1642 = vadd.f32 %v1619, %v1637
        %v1643 = vadd.f32 %v1620, %v1637
        %v1644 = vadd.f32 %v1621, %v1637
        %v1645 = vadd.f32 %v1622, %v1637
        %v1646 = vadd.f32 %v1623, %v1637
        %v1647 = vadd.f32 %v1624, %v1637
        %v1648 = vadd.f32 %v1625, %v1637
        %v1649 = vadd.f32 %v1626, %v1637
        %v1650 = vadd.f32 %v1627, %v1637
        %v1651 = vadd.f32 %v1628, %v1637
        %v1652 = vadd.f32 %v1629, %v1637
        %v1653 = vadd.f32 %v1630, %v1637
        %v1654 = vadd.f32 %v1631, %v1637
        %1655 = vst [vmem:[%s397] sm:$0xff] %v1639
        %1656 = vst [vmem:[%s397 + $0x8] sm:$0xff] %v1640
        %1657 = vst [vmem:[%s397 + $0x10] sm:$0xff] %v1641
        %1658 = vst [vmem:[%s397 + $0x18] sm:$0xff] %v1642
        %1659 = vst [vmem:[%s397 + $0x20] sm:$0xff] %v1643
        %1660 = vst [vmem:[%s397 + $0x28] sm:$0xff] %v1644
        %1661 = vst [vmem:[%s397 + $0x30] sm:$0xff] %v1645
        %1662 = vst [vmem:[%s397 + $0x38] sm:$0xff] %v1646
        %1663 = vst [vmem:[%s397 + $0x40] sm:$0xff] %v1647
        %1664 = vst [vmem:[%s397 + $0x48] sm:$0xff] %v1648
        %1665 = vst [vmem:[%s397 + $0x50] sm:$0xff] %v1649
        %1666 = vst [vmem:[%s397 + $0x58] sm:$0xff] %v1650
        %1667 = vst [vmem:[%s397 + $0x60] sm:$0xff] %v1651
        %1668 = vst [vmem:[%s397 + $0x68] sm:$0xff] %v1652
        %1669 = vst [vmem:[%s397 + $0x70] sm:$0xff] %v1653
        %1670 = vst [vmem:[%s397 + $0x78] sm:$0xff] %v1654
      $region72: #{_gcn_forward.1} parent=47 // pred_fallthru
        _
      %p1671 = scmp.eq.s32.totalorder %s23, 1
      %s1672 = scalar_select %p1671, %s24, 0
      %s1673 = smul.u32 16, %s1672
      %p1674 = scmp.lt.s32.totalorder %s1673, 15
      %s1675 = scalar_select %p1674, %s1673, 15
      %s1676 = smul.addr %s1675, 8
      %s1677 = scalar_lea.vmem %s7, %s1676
      // Predicated region
      $region73: #{_gcn_forward.1} parent=47 // pred_check
        %p1678 = pneg %p233
      $region74: #{_gcn_forward.1} parent=47 // pred_check_branch
        %1680 = sbr.rel (%p1678) target = $region76
      $region75: #{_gcn_forward.1} parent=47 // pred_region
        %p1681 = scmp.eq.s32.totalorder %s23, 1
        %s1682 = scalar_select %p1681, %s24, 0
        %s1683 = smul.u32 16, %s1682
      $region76: #{_gcn_forward.1} parent=47 // pred_fallthru
        _
    $region48: #{_gcn_forward.1} parent=5 // pred_fallthru
      _
    %p1684 = scmp.le.s32.totalorder 2, %s13
    // Predicated region
    $region77: #{_gcn_forward.1} parent=5 // pred_check
      %p1685 = pneg %p1684
    $region78: #{_gcn_forward.1} parent=5 // pred_check_branch
      %1687 = sbr.rel (%p1685) target = $region80
    $region79: #{_gcn_forward.1} parent=5 // pred_region
      %s1688 = ssub.s32 %s13, 2
      // Predicated region
      $region81: #{_gcn_forward.1} parent=79 // pred_check
        %p1689 = pneg %p239
      $region82: #{_gcn_forward.1} parent=79 // pred_check_branch
        %1691 = sbr.rel (%p1689) target = $region84
      $region83: #{_gcn_forward.1} parent=79 // pred_region
        %p1692 = scmp.eq.s32.totalorder %s26, 1
        %s1693 = scalar_select %p1692, %s27, 0
        %s1694 = smul.u32 16, %s1693
        %p1695 = scmp.lt.s32.totalorder %s1694, 15
        %s1696 = scalar_select %p1695, %s1694, 15
        %s1697 = smul.addr %s1696, 8
        %s1698 = scalar_lea.vmem %s7, %s1697
      $region84: #{_gcn_forward.1} parent=79 // pred_fallthru
        _
    $region80: #{_gcn_forward.1} parent=5 // pred_fallthru
      _
  $region6: #{_gcn_forward.1} parent=0 // loop_footer
    %s17 = sadd.s32 1, %s13
  $region7: #{_gcn_forward.1} parent=0 // loop_footer_branch
    %12 = sbr.rel target = $region3
  $region8: #{_gcn_forward.1} parent=0 // loop_exit
    _

</llo_original>
